<compile_context>
chip_gen: v6e
topology: v6e:2x2x1
jax: 0.10.0
libtpu: 0.0.40
codegen_flags: <defaults>
</compile_context>

<pallas_src>
import functools
import math

import jax
import jax.numpy as jnp
from jax import lax
from jax.experimental import pallas as pl
from jax.experimental.pallas import tpu as pltpu


def _trl_kernel(x_ref, mask_ref, wqkv_ref, bqkv_ref, wo_ref, bo_ref, out_ref,
                *, num_heads):
    # x_ref:    (B*S, 3D)  bf16  lane-dense [q | k | v] rows, batches stacked on M
    # mask_ref: (S, S)     f32   additive mask, PRE-scaled by 1/sqrt(d_k)
    # wqkv_ref: (3D, 3D)   bf16  block-diag(wq/sqrt(d_k), wk, wv), zeros elsewhere
    # bqkv_ref: (1, 3D)    f32   [bq/sqrt(d_k) | bk | bv]
    # wo_ref:   (D, Dp)    bf16  out_fc weight, zero-padded to Dp=128 lanes
    # bo_ref:   (1, Dp)    f32   out_fc bias, zero-padded
    # out_ref:  (B, S, Dp) f32
    B, S, Dp = out_ref.shape
    D = x_ref.shape[-1] // 3
    d_k = D // num_heads

    # ---- fused QKV projection: ONE MXU push, contraction depth 3D ----
    x = x_ref[...]                                               # (B*S, 3D) bf16
    proj = jnp.dot(x, wqkv_ref[...],
                   preferred_element_type=jnp.float32)           # (B*S, 3D) f32
    proj = proj + bqkv_ref[...]                                  # one (1,3D) add

    mask = mask_ref[...]                                         # (S, S) f32
    wo = wo_ref[...]                                             # (D, Dp) bf16
    bo = bo_ref[...]                                             # (1, Dp) f32

    for b in range(B):                                           # static unroll (B=2)
        pb = proj[b * S:(b + 1) * S]                             # (S, 3D) f32
        ctx_heads = []
        for h in range(num_heads):                               # static unroll (H=4)
            q = pb[:, h * d_k:(h + 1) * d_k]                     # already /sqrt(d_k)
            k = pb[:, D + h * d_k:D + (h + 1) * d_k]
            v = pb[:, 2 * D + h * d_k:2 * D + (h + 1) * d_k]

            # scores = (q k^T + mask) / sqrt(d_k); scale folded into q and mask
            scores = lax.dot_general(q.astype(jnp.bfloat16), k.astype(jnp.bfloat16),
                                     (((1,), (1,)), ((), ())),
                                     preferred_element_type=jnp.float32)   # (S, S)
            scores = scores + mask

            # numerically stable softmax in f32; exact reciprocal on the EUP
            m = jnp.max(scores, axis=-1, keepdims=True)
            e = jnp.exp(scores - m)
            s = jnp.sum(e, axis=-1, keepdims=True)
            probs = e * pl.reciprocal(s, approx=False)
            # TODO(synk): dropout omitted — dr_rate defaults to 0 (identity at p=0).

            ctx_heads.append(jnp.dot(probs.astype(jnp.bfloat16),
                                     v.astype(jnp.bfloat16),
                                     preferred_element_type=jnp.float32))  # (S, d_k)

        # lane-concat the head contexts and do ONE output projection per batch
        ctx = jnp.concatenate(ctx_heads, axis=-1).astype(jnp.bfloat16)     # (S, D)
        out_b = jnp.dot(ctx, wo, preferred_element_type=jnp.float32) + bo  # (S, Dp)
        out_ref[b] = out_b.astype(out_ref.dtype)


def make_mask(top_k):
    # Same construction as TemporalRelationalLayer._make_mask
    one = jnp.ones((top_k, top_k), jnp.float32)
    zero = jnp.zeros((top_k, top_k), jnp.float32)
    blk = jnp.concatenate(
        [jnp.concatenate([one, zero], axis=1),
         jnp.concatenate([zero, one], axis=1)], axis=0)
    eye = jnp.eye(2 * top_k, dtype=jnp.float32)
    sigma = -10000000000.0
    return sigma * (blk - eye)


def pack_trl_params(params, mask, *, num_heads):
    """One-time parameter packing (hoisted out of the per-call path)."""
    wq, bq, wk, bk, wv, bv, wo, bo = params
    D = wq.shape[0]
    d_k = D // num_heads
    Dp = ((max(D, 128) + 127) // 128) * 128
    inv = 1.0 / math.sqrt(d_k)

    # block-diagonal fused QKV weight; off-diagonal blocks are exact zeros.
    w_qkv = jnp.zeros((3 * D, 3 * D), jnp.float32)
    w_qkv = w_qkv.at[0:D, 0:D].set(wq * inv)        # fold 1/sqrt(d_k) into q
    w_qkv = w_qkv.at[D:2 * D, D:2 * D].set(wk)
    w_qkv = w_qkv.at[2 * D:, 2 * D:].set(wv)
    w_qkv = w_qkv.astype(jnp.bfloat16)

    b_qkv = jnp.concatenate([bq * inv, bk, bv]).reshape(1, 3 * D).astype(jnp.float32)

    wo_p = jnp.pad(wo, ((0, 0), (0, Dp - D))).astype(jnp.bfloat16)      # (D, Dp)
    bo_p = jnp.pad(bo, (0, Dp - D)).reshape(1, Dp).astype(jnp.float32)  # (1, Dp)

    mask_scaled = (mask * inv).astype(jnp.float32)

    return jax.block_until_ready((w_qkv, b_qkv, wo_p, bo_p, mask_scaled))


def temporal_relational_layer(query, key, value, packed, *, num_heads):
    w_qkv, b_qkv, wo_p, bo_p, mask_scaled = packed
    B, S, D = query.shape
    Dp = wo_p.shape[1]
    d_k = D // num_heads

    # single lane-dense activation buffer: (B*S, 3D) bf16 (direct matmul LHS)
    x = jnp.concatenate([query, key, value], axis=-1).astype(jnp.bfloat16)
    x = x.reshape(B * S, 3 * D)

    flops = (2 * (B * S) * (3 * D) * (3 * D)                 # fused projection
             + B * num_heads * 2 * (2 * S * S * d_k)         # scores + ctx
             + B * 2 * S * D * Dp)                           # output projection
    transcendentals = B * num_heads * S * (S + 1)            # exp + reciprocal
    bytes_accessed = (x.size * 2 + mask_scaled.size * 4 + w_qkv.size * 2
                      + b_qkv.size * 4 + wo_p.size * 2 + bo_p.size * 4
                      + B * S * Dp * 4)

    out_padded = pl.pallas_call(
        functools.partial(_trl_kernel, num_heads=num_heads),
        out_shape=jax.ShapeDtypeStruct((B, S, Dp), jnp.float32),
        grid_spec=pltpu.PrefetchScalarGridSpec(
            num_scalar_prefetch=0,
            grid=(1,),   # single step: batch is folded into the M/sublane axis
            in_specs=[
                pl.BlockSpec((B * S, 3 * D), lambda i: (0, 0)),
                pl.BlockSpec((S, S), lambda i: (0, 0)),
                pl.BlockSpec((3 * D, 3 * D), lambda i: (0, 0)),
                pl.BlockSpec((1, 3 * D), lambda i: (0, 0)),
                pl.BlockSpec((D, Dp), lambda i: (0, 0)),
                pl.BlockSpec((1, Dp), lambda i: (0, 0)),
            ],
            out_specs=pl.BlockSpec((B, S, Dp), lambda i: (0, 0, 0)),
        ),
        compiler_params=pltpu.CompilerParams(
            dimension_semantics=("arbitrary",)),
        cost_estimate=pl.CostEstimate(
            flops=int(flops),
            transcendentals=int(transcendentals),
            bytes_accessed=int(bytes_accessed)),
    )(x, mask_scaled, w_qkv, b_qkv, wo_p, bo_p)

    # strip the lane padding back to the real model width
    return out_padded[:, :, :D].astype(query.dtype)


def reference(query, key, value, mask, params, *, num_heads):
    # Plain-JAX (f32) reproduction of the PyTorch forward for verification.
    wq, bq, wk, bk, wv, bv, wo, bo = params
    B, S, D = query.shape
    d_k = D // num_heads

    def proj(x, w, b):
        y = x @ w + b
        return y.reshape(B, S, num_heads, d_k).transpose(0, 2, 1, 3)

    q = proj(query, wq, bq)
    k = proj(key, wk, bk)
    v = proj(value, wv, bv)
    scores = jnp.einsum("bhqd,bhkd->bhqk", q, k)
    scores = (scores + mask[None, None]) / math.sqrt(d_k)
    probs = jax.nn.softmax(scores, axis=-1)
    out = jnp.einsum("bhqk,bhkd->bhqd", probs, v)
    out = out.transpose(0, 2, 1, 3).reshape(B, S, D)
    return out @ wo + bo


if __name__ == "__main__":
    B = 2
    top_k = 8
    S = 2 * top_k          # mask is (2*topK, 2*topK) => sequence length 16
    d_model = 32
    num_heads = 4

    key0 = jax.random.PRNGKey(0)
    ks = jax.random.split(key0, 11)

    # Deterministic parameter init (already transposed to (D_in, D_out)).
    scale = 1.0 / math.sqrt(d_model)
    wq = jax.random.uniform(ks[0], (d_model, d_model), jnp.float32, -scale, scale)
    bq = jax.random.uniform(ks[1], (d_model,), jnp.float32, -scale, scale)
    wk = jax.random.uniform(ks[2], (d_model, d_model), jnp.float32, -scale, scale)
    bk = jax.random.uniform(ks[3], (d_model,), jnp.float32, -scale, scale)
    wv = jax.random.uniform(ks[4], (d_model, d_model), jnp.float32, -scale, scale)
    bv = jax.random.uniform(ks[5], (d_model,), jnp.float32, -scale, scale)
    wo = jax.random.uniform(ks[6], (d_model, d_model), jnp.float32, -scale, scale)
    bo = jax.random.uniform(ks[7], (d_model,), jnp.float32, -scale, scale)
    params = (wq, bq, wk, bk, wv, bv, wo, bo)

    query = jax.random.normal(ks[8], (B, S, d_model), jnp.float32)
    keyx = jax.random.normal(ks[9], (B, S, d_model), jnp.float32)
    value = jax.random.normal(ks[10], (B, S, d_model), jnp.float32)

    mask = make_mask(top_k)

    # One-time packing (NOT in the per-call path).
    packed = pack_trl_params(params, mask, num_heads=num_heads)

    out = temporal_relational_layer(query, keyx, value, packed,
                                    num_heads=num_heads)
    out = jax.block_until_ready(out)

    ref = reference(query, keyx, value, mask, params, num_heads=num_heads)
    assert out.shape == (B, S, d_model)
    # bf16 MXU operands => compare with a bf16-level tolerance
    assert jnp.allclose(out, ref, atol=5e-2, rtol=5e-2)

    print("KERNEL_OK")
</pallas_src>

<mosaic_0001>
module attributes {stable_mosaic.version = 11 : i64} {
  func.func @_trl_kernel(%arg0: i32, %arg1: memref<32x96xbf16, #tpu.memory_space<vmem>>, %arg2: memref<16x16xf32, #tpu.memory_space<vmem>>, %arg3: memref<96x96xbf16, #tpu.memory_space<vmem>>, %arg4: memref<1x96xf32, #tpu.memory_space<vmem>>, %arg5: memref<32x128xbf16, #tpu.memory_space<vmem>>, %arg6: memref<1x128xf32, #tpu.memory_space<vmem>>, %arg7: memref<2x16x128xf32, #tpu.memory_space<vmem>>) attributes {dimension_semantics = [#tpu.dimension_semantics<arbitrary>], iteration_bounds = array<i64: 1>, scalar_prefetch = 0 : i64, scratch_operands = 0 : i64, tpu.core_type = #tpu.core_type<tc>, window_params = [{pipeline_mode = #tpu.pipeline_mode<synchronous>, transform_indices = @transform_0, window_bounds = array<i64: 32, 96>}, {pipeline_mode = #tpu.pipeline_mode<synchronous>, transform_indices = @transform_1, window_bounds = array<i64: 16, 16>}, {pipeline_mode = #tpu.pipeline_mode<synchronous>, transform_indices = @transform_2, window_bounds = array<i64: 96, 96>}, {pipeline_mode = #tpu.pipeline_mode<synchronous>, transform_indices = @transform_3, window_bounds = array<i64: 1, 96>}, {pipeline_mode = #tpu.pipeline_mode<synchronous>, transform_indices = @transform_4, window_bounds = array<i64: 32, 128>}, {pipeline_mode = #tpu.pipeline_mode<synchronous>, transform_indices = @transform_5, window_bounds = array<i64: 1, 128>}, {pipeline_mode = #tpu.pipeline_mode<synchronous>, transform_indices = @transform_6, window_bounds = array<i64: 2, 16, 128>}]} {
    %c0 = arith.constant 0 : index
    %c0_0 = arith.constant 0 : index
    %0 = vector.load %arg1[%c0, %c0_0] : memref<32x96xbf16, #tpu.memory_space<vmem>>, vector<32x96xbf16>
    %c0_1 = arith.constant 0 : index
    %c0_2 = arith.constant 0 : index
    %1 = vector.load %arg3[%c0_1, %c0_2] : memref<96x96xbf16, #tpu.memory_space<vmem>>, vector<96x96xbf16>
    %cst = arith.constant dense<0.000000e+00> : vector<32x96xf32>
    %2 = tpu.matmul %0, %1, %cst {dimension_numbers = #tpu.dot_dimension_numbers<[1], [0], [0], [1], [0, 0, 1, 1], [], []>} : vector<32x96xbf16>, vector<96x96xbf16>, vector<32x96xf32> -> vector<32x96xf32>
    %c0_3 = arith.constant 0 : index
    %c0_4 = arith.constant 0 : index
    %3 = vector.load %arg4[%c0_3, %c0_4] : memref<1x96xf32, #tpu.memory_space<vmem>>, vector<1x96xf32>
    %4 = vector.broadcast %3 : vector<1x96xf32> to vector<32x96xf32>
    %5 = arith.addf %2, %4 : vector<32x96xf32>
    %c0_5 = arith.constant 0 : index
    %c0_6 = arith.constant 0 : index
    %6 = vector.load %arg2[%c0_5, %c0_6] : memref<16x16xf32, #tpu.memory_space<vmem>>, vector<16x16xf32>
    %c0_7 = arith.constant 0 : index
    %c0_8 = arith.constant 0 : index
    %7 = vector.load %arg5[%c0_7, %c0_8] : memref<32x128xbf16, #tpu.memory_space<vmem>>, vector<32x128xbf16>
    %c0_9 = arith.constant 0 : index
    %c0_10 = arith.constant 0 : index
    %8 = vector.load %arg6[%c0_9, %c0_10] : memref<1x128xf32, #tpu.memory_space<vmem>>, vector<1x128xf32>
    %9 = vector.extract_strided_slice %5 {offsets = [0, 0], sizes = [16, 96], strides = [1, 1]} : vector<32x96xf32> to vector<16x96xf32>
    %10 = vector.extract_strided_slice %9 {offsets = [0, 0], sizes = [16, 8], strides = [1, 1]} : vector<16x96xf32> to vector<16x8xf32>
    %11 = vector.extract_strided_slice %9 {offsets = [0, 32], sizes = [16, 8], strides = [1, 1]} : vector<16x96xf32> to vector<16x8xf32>
    %12 = vector.extract_strided_slice %9 {offsets = [0, 64], sizes = [16, 8], strides = [1, 1]} : vector<16x96xf32> to vector<16x8xf32>
    %13 = arith.truncf %10 : vector<16x8xf32> to vector<16x8xbf16>
    %14 = arith.truncf %11 : vector<16x8xf32> to vector<16x8xbf16>
    %cst_11 = arith.constant dense<0.000000e+00> : vector<16x16xf32>
    %15 = tpu.matmul %13, %14, %cst_11 {dimension_numbers = #tpu.dot_dimension_numbers<[1], [1], [0], [0], [0, 0, 1, 0], [], []>} : vector<16x8xbf16>, vector<16x8xbf16>, vector<16x16xf32> -> vector<16x16xf32>
    %16 = arith.addf %15, %6 : vector<16x16xf32>
    %cst_12 = arith.constant dense<0xFF800000> : vector<16xf32>
    %17 = vector.multi_reduction <maximumf>, %16, %cst_12 [1] : vector<16x16xf32> to vector<16xf32>
    %18 = vector.shape_cast %17 : vector<16xf32> to vector<16x1xf32>
    %19 = vector.broadcast %18 : vector<16x1xf32> to vector<16x16xf32>
    %20 = arith.subf %16, %19 : vector<16x16xf32>
    %21 = math.exp %20 : vector<16x16xf32>
    %cst_13 = arith.constant dense<0.000000e+00> : vector<16xf32>
    %22 = vector.multi_reduction <add>, %21, %cst_13 [1] : vector<16x16xf32> to vector<16xf32>
    %23 = vector.shape_cast %22 : vector<16xf32> to vector<16x1xf32>
    %24 = tpu.reciprocal %23 : vector<16x1xf32> -> vector<16x1xf32>
    %25 = vector.broadcast %24 : vector<16x1xf32> to vector<16x16xf32>
    %26 = arith.mulf %21, %25 : vector<16x16xf32>
    %27 = arith.truncf %26 : vector<16x16xf32> to vector<16x16xbf16>
    %28 = arith.truncf %12 : vector<16x8xf32> to vector<16x8xbf16>
    %cst_14 = arith.constant dense<0.000000e+00> : vector<16x8xf32>
    %29 = tpu.matmul %27, %28, %cst_14 {dimension_numbers = #tpu.dot_dimension_numbers<[1], [0], [0], [1], [0, 0, 1, 1], [], []>} : vector<16x16xbf16>, vector<16x8xbf16>, vector<16x8xf32> -> vector<16x8xf32>
    %30 = vector.extract_strided_slice %9 {offsets = [0, 8], sizes = [16, 8], strides = [1, 1]} : vector<16x96xf32> to vector<16x8xf32>
    %31 = vector.extract_strided_slice %9 {offsets = [0, 40], sizes = [16, 8], strides = [1, 1]} : vector<16x96xf32> to vector<16x8xf32>
    %32 = vector.extract_strided_slice %9 {offsets = [0, 72], sizes = [16, 8], strides = [1, 1]} : vector<16x96xf32> to vector<16x8xf32>
    %33 = arith.truncf %30 : vector<16x8xf32> to vector<16x8xbf16>
    %34 = arith.truncf %31 : vector<16x8xf32> to vector<16x8xbf16>
    %cst_15 = arith.constant dense<0.000000e+00> : vector<16x16xf32>
    %35 = tpu.matmul %33, %34, %cst_15 {dimension_numbers = #tpu.dot_dimension_numbers<[1], [1], [0], [0], [0, 0, 1, 0], [], []>} : vector<16x8xbf16>, vector<16x8xbf16>, vector<16x16xf32> -> vector<16x16xf32>
    %36 = arith.addf %35, %6 : vector<16x16xf32>
    %cst_16 = arith.constant dense<0xFF800000> : vector<16xf32>
    %37 = vector.multi_reduction <maximumf>, %36, %cst_16 [1] : vector<16x16xf32> to vector<16xf32>
    %38 = vector.shape_cast %37 : vector<16xf32> to vector<16x1xf32>
    %39 = vector.broadcast %38 : vector<16x1xf32> to vector<16x16xf32>
    %40 = arith.subf %36, %39 : vector<16x16xf32>
    %41 = math.exp %40 : vector<16x16xf32>
    %cst_17 = arith.constant dense<0.000000e+00> : vector<16xf32>
    %42 = vector.multi_reduction <add>, %41, %cst_17 [1] : vector<16x16xf32> to vector<16xf32>
    %43 = vector.shape_cast %42 : vector<16xf32> to vector<16x1xf32>
    %44 = tpu.reciprocal %43 : vector<16x1xf32> -> vector<16x1xf32>
    %45 = vector.broadcast %44 : vector<16x1xf32> to vector<16x16xf32>
    %46 = arith.mulf %41, %45 : vector<16x16xf32>
    %47 = arith.truncf %46 : vector<16x16xf32> to vector<16x16xbf16>
    %48 = arith.truncf %32 : vector<16x8xf32> to vector<16x8xbf16>
    %cst_18 = arith.constant dense<0.000000e+00> : vector<16x8xf32>
    %49 = tpu.matmul %47, %48, %cst_18 {dimension_numbers = #tpu.dot_dimension_numbers<[1], [0], [0], [1], [0, 0, 1, 1], [], []>} : vector<16x16xbf16>, vector<16x8xbf16>, vector<16x8xf32> -> vector<16x8xf32>
    %50 = vector.extract_strided_slice %9 {offsets = [0, 16], sizes = [16, 8], strides = [1, 1]} : vector<16x96xf32> to vector<16x8xf32>
    %51 = vector.extract_strided_slice %9 {offsets = [0, 48], sizes = [16, 8], strides = [1, 1]} : vector<16x96xf32> to vector<16x8xf32>
    %52 = vector.extract_strided_slice %9 {offsets = [0, 80], sizes = [16, 8], strides = [1, 1]} : vector<16x96xf32> to vector<16x8xf32>
    %53 = arith.truncf %50 : vector<16x8xf32> to vector<16x8xbf16>
    %54 = arith.truncf %51 : vector<16x8xf32> to vector<16x8xbf16>
    %cst_19 = arith.constant dense<0.000000e+00> : vector<16x16xf32>
    %55 = tpu.matmul %53, %54, %cst_19 {dimension_numbers = #tpu.dot_dimension_numbers<[1], [1], [0], [0], [0, 0, 1, 0], [], []>} : vector<16x8xbf16>, vector<16x8xbf16>, vector<16x16xf32> -> vector<16x16xf32>
    %56 = arith.addf %55, %6 : vector<16x16xf32>
    %cst_20 = arith.constant dense<0xFF800000> : vector<16xf32>
    %57 = vector.multi_reduction <maximumf>, %56, %cst_20 [1] : vector<16x16xf32> to vector<16xf32>
    %58 = vector.shape_cast %57 : vector<16xf32> to vector<16x1xf32>
    %59 = vector.broadcast %58 : vector<16x1xf32> to vector<16x16xf32>
    %60 = arith.subf %56, %59 : vector<16x16xf32>
    %61 = math.exp %60 : vector<16x16xf32>
    %cst_21 = arith.constant dense<0.000000e+00> : vector<16xf32>
    %62 = vector.multi_reduction <add>, %61, %cst_21 [1] : vector<16x16xf32> to vector<16xf32>
    %63 = vector.shape_cast %62 : vector<16xf32> to vector<16x1xf32>
    %64 = tpu.reciprocal %63 : vector<16x1xf32> -> vector<16x1xf32>
    %65 = vector.broadcast %64 : vector<16x1xf32> to vector<16x16xf32>
    %66 = arith.mulf %61, %65 : vector<16x16xf32>
    %67 = arith.truncf %66 : vector<16x16xf32> to vector<16x16xbf16>
    %68 = arith.truncf %52 : vector<16x8xf32> to vector<16x8xbf16>
    %cst_22 = arith.constant dense<0.000000e+00> : vector<16x8xf32>
    %69 = tpu.matmul %67, %68, %cst_22 {dimension_numbers = #tpu.dot_dimension_numbers<[1], [0], [0], [1], [0, 0, 1, 1], [], []>} : vector<16x16xbf16>, vector<16x8xbf16>, vector<16x8xf32> -> vector<16x8xf32>
    %70 = vector.extract_strided_slice %9 {offsets = [0, 24], sizes = [16, 8], strides = [1, 1]} : vector<16x96xf32> to vector<16x8xf32>
    %71 = vector.extract_strided_slice %9 {offsets = [0, 56], sizes = [16, 8], strides = [1, 1]} : vector<16x96xf32> to vector<16x8xf32>
    %72 = vector.extract_strided_slice %9 {offsets = [0, 88], sizes = [16, 8], strides = [1, 1]} : vector<16x96xf32> to vector<16x8xf32>
    %73 = arith.truncf %70 : vector<16x8xf32> to vector<16x8xbf16>
    %74 = arith.truncf %71 : vector<16x8xf32> to vector<16x8xbf16>
    %cst_23 = arith.constant dense<0.000000e+00> : vector<16x16xf32>
    %75 = tpu.matmul %73, %74, %cst_23 {dimension_numbers = #tpu.dot_dimension_numbers<[1], [1], [0], [0], [0, 0, 1, 0], [], []>} : vector<16x8xbf16>, vector<16x8xbf16>, vector<16x16xf32> -> vector<16x16xf32>
    %76 = arith.addf %75, %6 : vector<16x16xf32>
    %cst_24 = arith.constant dense<0xFF800000> : vector<16xf32>
    %77 = vector.multi_reduction <maximumf>, %76, %cst_24 [1] : vector<16x16xf32> to vector<16xf32>
    %78 = vector.shape_cast %77 : vector<16xf32> to vector<16x1xf32>
    %79 = vector.broadcast %78 : vector<16x1xf32> to vector<16x16xf32>
    %80 = arith.subf %76, %79 : vector<16x16xf32>
    %81 = math.exp %80 : vector<16x16xf32>
    %cst_25 = arith.constant dense<0.000000e+00> : vector<16xf32>
    %82 = vector.multi_reduction <add>, %81, %cst_25 [1] : vector<16x16xf32> to vector<16xf32>
    %83 = vector.shape_cast %82 : vector<16xf32> to vector<16x1xf32>
    %84 = tpu.reciprocal %83 : vector<16x1xf32> -> vector<16x1xf32>
    %85 = vector.broadcast %84 : vector<16x1xf32> to vector<16x16xf32>
    %86 = arith.mulf %81, %85 : vector<16x16xf32>
    %87 = arith.truncf %86 : vector<16x16xf32> to vector<16x16xbf16>
    %88 = arith.truncf %72 : vector<16x8xf32> to vector<16x8xbf16>
    %cst_26 = arith.constant dense<0.000000e+00> : vector<16x8xf32>
    %89 = tpu.matmul %87, %88, %cst_26 {dimension_numbers = #tpu.dot_dimension_numbers<[1], [0], [0], [1], [0, 0, 1, 1], [], []>} : vector<16x16xbf16>, vector<16x8xbf16>, vector<16x8xf32> -> vector<16x8xf32>
    %90 = tpu.concatenate %29, %49, %69, %89 in 1 : vector<16x8xf32>, vector<16x8xf32>, vector<16x8xf32>, vector<16x8xf32> -> vector<16x32xf32>
    %91 = arith.truncf %90 : vector<16x32xf32> to vector<16x32xbf16>
    %cst_27 = arith.constant dense<0.000000e+00> : vector<16x128xf32>
    %92 = tpu.matmul %91, %7, %cst_27 {dimension_numbers = #tpu.dot_dimension_numbers<[1], [0], [0], [1], [0, 0, 1, 1], [], []>} : vector<16x32xbf16>, vector<32x128xbf16>, vector<16x128xf32> -> vector<16x128xf32>
    %93 = vector.broadcast %8 : vector<1x128xf32> to vector<16x128xf32>
    %94 = arith.addf %92, %93 : vector<16x128xf32>
    %c0_28 = arith.constant 0 : index
    %c0_29 = arith.constant 0 : index
    %c0_30 = arith.constant 0 : index
    %95 = vector.load %arg7[%c0_28, %c0_29, %c0_30] : memref<2x16x128xf32, #tpu.memory_space<vmem>>, vector<1x16x128xf32>
    %96 = vector.shape_cast %95 : vector<1x16x128xf32> to vector<16x128xf32>
    %97 = vector.shape_cast %94 : vector<16x128xf32> to vector<1x16x128xf32>
    tpu.vector_store %arg7[%c0_28, %c0_29, %c0_30], %97 {strides = array<i32>} : memref<2x16x128xf32, #tpu.memory_space<vmem>>, vector<1x16x128xf32>,
    %98 = vector.extract_strided_slice %5 {offsets = [16, 0], sizes = [16, 96], strides = [1, 1]} : vector<32x96xf32> to vector<16x96xf32>
    %99 = vector.extract_strided_slice %98 {offsets = [0, 0], sizes = [16, 8], strides = [1, 1]} : vector<16x96xf32> to vector<16x8xf32>
    %100 = vector.extract_strided_slice %98 {offsets = [0, 32], sizes = [16, 8], strides = [1, 1]} : vector<16x96xf32> to vector<16x8xf32>
    %101 = vector.extract_strided_slice %98 {offsets = [0, 64], sizes = [16, 8], strides = [1, 1]} : vector<16x96xf32> to vector<16x8xf32>
    %102 = arith.truncf %99 : vector<16x8xf32> to vector<16x8xbf16>
    %103 = arith.truncf %100 : vector<16x8xf32> to vector<16x8xbf16>
    %cst_31 = arith.constant dense<0.000000e+00> : vector<16x16xf32>
    %104 = tpu.matmul %102, %103, %cst_31 {dimension_numbers = #tpu.dot_dimension_numbers<[1], [1], [0], [0], [0, 0, 1, 0], [], []>} : vector<16x8xbf16>, vector<16x8xbf16>, vector<16x16xf32> -> vector<16x16xf32>
    %105 = arith.addf %104, %6 : vector<16x16xf32>
    %cst_32 = arith.constant dense<0xFF800000> : vector<16xf32>
    %106 = vector.multi_reduction <maximumf>, %105, %cst_32 [1] : vector<16x16xf32> to vector<16xf32>
    %107 = vector.shape_cast %106 : vector<16xf32> to vector<16x1xf32>
    %108 = vector.broadcast %107 : vector<16x1xf32> to vector<16x16xf32>
    %109 = arith.subf %105, %108 : vector<16x16xf32>
    %110 = math.exp %109 : vector<16x16xf32>
    %cst_33 = arith.constant dense<0.000000e+00> : vector<16xf32>
    %111 = vector.multi_reduction <add>, %110, %cst_33 [1] : vector<16x16xf32> to vector<16xf32>
    %112 = vector.shape_cast %111 : vector<16xf32> to vector<16x1xf32>
    %113 = tpu.reciprocal %112 : vector<16x1xf32> -> vector<16x1xf32>
    %114 = vector.broadcast %113 : vector<16x1xf32> to vector<16x16xf32>
    %115 = arith.mulf %110, %114 : vector<16x16xf32>
    %116 = arith.truncf %115 : vector<16x16xf32> to vector<16x16xbf16>
    %117 = arith.truncf %101 : vector<16x8xf32> to vector<16x8xbf16>
    %cst_34 = arith.constant dense<0.000000e+00> : vector<16x8xf32>
    %118 = tpu.matmul %116, %117, %cst_34 {dimension_numbers = #tpu.dot_dimension_numbers<[1], [0], [0], [1], [0, 0, 1, 1], [], []>} : vector<16x16xbf16>, vector<16x8xbf16>, vector<16x8xf32> -> vector<16x8xf32>
    %119 = vector.extract_strided_slice %98 {offsets = [0, 8], sizes = [16, 8], strides = [1, 1]} : vector<16x96xf32> to vector<16x8xf32>
    %120 = vector.extract_strided_slice %98 {offsets = [0, 40], sizes = [16, 8], strides = [1, 1]} : vector<16x96xf32> to vector<16x8xf32>
    %121 = vector.extract_strided_slice %98 {offsets = [0, 72], sizes = [16, 8], strides = [1, 1]} : vector<16x96xf32> to vector<16x8xf32>
    %122 = arith.truncf %119 : vector<16x8xf32> to vector<16x8xbf16>
    %123 = arith.truncf %120 : vector<16x8xf32> to vector<16x8xbf16>
    %cst_35 = arith.constant dense<0.000000e+00> : vector<16x16xf32>
    %124 = tpu.matmul %122, %123, %cst_35 {dimension_numbers = #tpu.dot_dimension_numbers<[1], [1], [0], [0], [0, 0, 1, 0], [], []>} : vector<16x8xbf16>, vector<16x8xbf16>, vector<16x16xf32> -> vector<16x16xf32>
    %125 = arith.addf %124, %6 : vector<16x16xf32>
    %cst_36 = arith.constant dense<0xFF800000> : vector<16xf32>
    %126 = vector.multi_reduction <maximumf>, %125, %cst_36 [1] : vector<16x16xf32> to vector<16xf32>
    %127 = vector.shape_cast %126 : vector<16xf32> to vector<16x1xf32>
    %128 = vector.broadcast %127 : vector<16x1xf32> to vector<16x16xf32>
    %129 = arith.subf %125, %128 : vector<16x16xf32>
    %130 = math.exp %129 : vector<16x16xf32>
    %cst_37 = arith.constant dense<0.000000e+00> : vector<16xf32>
    %131 = vector.multi_reduction <add>, %130, %cst_37 [1] : vector<16x16xf32> to vector<16xf32>
    %132 = vector.shape_cast %131 : vector<16xf32> to vector<16x1xf32>
    %133 = tpu.reciprocal %132 : vector<16x1xf32> -> vector<16x1xf32>
    %134 = vector.broadcast %133 : vector<16x1xf32> to vector<16x16xf32>
    %135 = arith.mulf %130, %134 : vector<16x16xf32>
    %136 = arith.truncf %135 : vector<16x16xf32> to vector<16x16xbf16>
    %137 = arith.truncf %121 : vector<16x8xf32> to vector<16x8xbf16>
    %cst_38 = arith.constant dense<0.000000e+00> : vector<16x8xf32>
    %138 = tpu.matmul %136, %137, %cst_38 {dimension_numbers = #tpu.dot_dimension_numbers<[1], [0], [0], [1], [0, 0, 1, 1], [], []>} : vector<16x16xbf16>, vector<16x8xbf16>, vector<16x8xf32> -> vector<16x8xf32>
    %139 = vector.extract_strided_slice %98 {offsets = [0, 16], sizes = [16, 8], strides = [1, 1]} : vector<16x96xf32> to vector<16x8xf32>
    %140 = vector.extract_strided_slice %98 {offsets = [0, 48], sizes = [16, 8], strides = [1, 1]} : vector<16x96xf32> to vector<16x8xf32>
    %141 = vector.extract_strided_slice %98 {offsets = [0, 80], sizes = [16, 8], strides = [1, 1]} : vector<16x96xf32> to vector<16x8xf32>
    %142 = arith.truncf %139 : vector<16x8xf32> to vector<16x8xbf16>
    %143 = arith.truncf %140 : vector<16x8xf32> to vector<16x8xbf16>
    %cst_39 = arith.constant dense<0.000000e+00> : vector<16x16xf32>
    %144 = tpu.matmul %142, %143, %cst_39 {dimension_numbers = #tpu.dot_dimension_numbers<[1], [1], [0], [0], [0, 0, 1, 0], [], []>} : vector<16x8xbf16>, vector<16x8xbf16>, vector<16x16xf32> -> vector<16x16xf32>
    %145 = arith.addf %144, %6 : vector<16x16xf32>
    %cst_40 = arith.constant dense<0xFF800000> : vector<16xf32>
    %146 = vector.multi_reduction <maximumf>, %145, %cst_40 [1] : vector<16x16xf32> to vector<16xf32>
    %147 = vector.shape_cast %146 : vector<16xf32> to vector<16x1xf32>
    %148 = vector.broadcast %147 : vector<16x1xf32> to vector<16x16xf32>
    %149 = arith.subf %145, %148 : vector<16x16xf32>
    %150 = math.exp %149 : vector<16x16xf32>
    %cst_41 = arith.constant dense<0.000000e+00> : vector<16xf32>
    %151 = vector.multi_reduction <add>, %150, %cst_41 [1] : vector<16x16xf32> to vector<16xf32>
    %152 = vector.shape_cast %151 : vector<16xf32> to vector<16x1xf32>
    %153 = tpu.reciprocal %152 : vector<16x1xf32> -> vector<16x1xf32>
    %154 = vector.broadcast %153 : vector<16x1xf32> to vector<16x16xf32>
    %155 = arith.mulf %150, %154 : vector<16x16xf32>
    %156 = arith.truncf %155 : vector<16x16xf32> to vector<16x16xbf16>
    %157 = arith.truncf %141 : vector<16x8xf32> to vector<16x8xbf16>
    %cst_42 = arith.constant dense<0.000000e+00> : vector<16x8xf32>
    %158 = tpu.matmul %156, %157, %cst_42 {dimension_numbers = #tpu.dot_dimension_numbers<[1], [0], [0], [1], [0, 0, 1, 1], [], []>} : vector<16x16xbf16>, vector<16x8xbf16>, vector<16x8xf32> -> vector<16x8xf32>
    %159 = vector.extract_strided_slice %98 {offsets = [0, 24], sizes = [16, 8], strides = [1, 1]} : vector<16x96xf32> to vector<16x8xf32>
    %160 = vector.extract_strided_slice %98 {offsets = [0, 56], sizes = [16, 8], strides = [1, 1]} : vector<16x96xf32> to vector<16x8xf32>
    %161 = vector.extract_strided_slice %98 {offsets = [0, 88], sizes = [16, 8], strides = [1, 1]} : vector<16x96xf32> to vector<16x8xf32>
    %162 = arith.truncf %159 : vector<16x8xf32> to vector<16x8xbf16>
    %163 = arith.truncf %160 : vector<16x8xf32> to vector<16x8xbf16>
    %cst_43 = arith.constant dense<0.000000e+00> : vector<16x16xf32>
    %164 = tpu.matmul %162, %163, %cst_43 {dimension_numbers = #tpu.dot_dimension_numbers<[1], [1], [0], [0], [0, 0, 1, 0], [], []>} : vector<16x8xbf16>, vector<16x8xbf16>, vector<16x16xf32> -> vector<16x16xf32>
    %165 = arith.addf %164, %6 : vector<16x16xf32>
    %cst_44 = arith.constant dense<0xFF800000> : vector<16xf32>
    %166 = vector.multi_reduction <maximumf>, %165, %cst_44 [1] : vector<16x16xf32> to vector<16xf32>
    %167 = vector.shape_cast %166 : vector<16xf32> to vector<16x1xf32>
    %168 = vector.broadcast %167 : vector<16x1xf32> to vector<16x16xf32>
    %169 = arith.subf %165, %168 : vector<16x16xf32>
    %170 = math.exp %169 : vector<16x16xf32>
    %cst_45 = arith.constant dense<0.000000e+00> : vector<16xf32>
    %171 = vector.multi_reduction <add>, %170, %cst_45 [1] : vector<16x16xf32> to vector<16xf32>
    %172 = vector.shape_cast %171 : vector<16xf32> to vector<16x1xf32>
    %173 = tpu.reciprocal %172 : vector<16x1xf32> -> vector<16x1xf32>
    %174 = vector.broadcast %173 : vector<16x1xf32> to vector<16x16xf32>
    %175 = arith.mulf %170, %174 : vector<16x16xf32>
    %176 = arith.truncf %175 : vector<16x16xf32> to vector<16x16xbf16>
    %177 = arith.truncf %161 : vector<16x8xf32> to vector<16x8xbf16>
    %cst_46 = arith.constant dense<0.000000e+00> : vector<16x8xf32>
    %178 = tpu.matmul %176, %177, %cst_46 {dimension_numbers = #tpu.dot_dimension_numbers<[1], [0], [0], [1], [0, 0, 1, 1], [], []>} : vector<16x16xbf16>, vector<16x8xbf16>, vector<16x8xf32> -> vector<16x8xf32>
    %179 = tpu.concatenate %118, %138, %158, %178 in 1 : vector<16x8xf32>, vector<16x8xf32>, vector<16x8xf32>, vector<16x8xf32> -> vector<16x32xf32>
    %180 = arith.truncf %179 : vector<16x32xf32> to vector<16x32xbf16>
    %cst_47 = arith.constant dense<0.000000e+00> : vector<16x128xf32>
    %181 = tpu.matmul %180, %7, %cst_47 {dimension_numbers = #tpu.dot_dimension_numbers<[1], [0], [0], [1], [0, 0, 1, 1], [], []>} : vector<16x32xbf16>, vector<32x128xbf16>, vector<16x128xf32> -> vector<16x128xf32>
    %182 = vector.broadcast %8 : vector<1x128xf32> to vector<16x128xf32>
    %183 = arith.addf %181, %182 : vector<16x128xf32>
    %c1 = arith.constant 1 : index
    %c0_48 = arith.constant 0 : index
    %c0_49 = arith.constant 0 : index
    %184 = vector.load %arg7[%c1, %c0_48, %c0_49] : memref<2x16x128xf32, #tpu.memory_space<vmem>>, vector<1x16x128xf32>
    %185 = vector.shape_cast %184 : vector<1x16x128xf32> to vector<16x128xf32>
    %186 = vector.shape_cast %183 : vector<16x128xf32> to vector<1x16x128xf32>
    tpu.vector_store %arg7[%c1, %c0_48, %c0_49], %186 {strides = array<i32>} : memref<2x16x128xf32, #tpu.memory_space<vmem>>, vector<1x16x128xf32>,
    return
  }
  func.func @transform_0(%arg0: i32) -> (i32, i32) {
    %c0_i32 = arith.constant 0 : i32
    %c0_i32_0 = arith.constant 0 : i32
    %c0_i32_1 = arith.constant 0 : i32
    return %c0_i32, %c0_i32_0 : i32, i32
  }
  func.func @transform_1(%arg0: i32) -> (i32, i32) {
    %c0_i32 = arith.constant 0 : i32
    %c0_i32_0 = arith.constant 0 : i32
    %c0_i32_1 = arith.constant 0 : i32
    return %c0_i32, %c0_i32_0 : i32, i32
  }
  func.func @transform_2(%arg0: i32) -> (i32, i32) {
    %c0_i32 = arith.constant 0 : i32
    %c0_i32_0 = arith.constant 0 : i32
    %c0_i32_1 = arith.constant 0 : i32
    return %c0_i32, %c0_i32_0 : i32, i32
  }
  func.func @transform_3(%arg0: i32) -> (i32, i32) {
    %c0_i32 = arith.constant 0 : i32
    %c0_i32_0 = arith.constant 0 : i32
    %c0_i32_1 = arith.constant 0 : i32
    return %c0_i32, %c0_i32_0 : i32, i32
  }
  func.func @transform_4(%arg0: i32) -> (i32, i32) {
    %c0_i32 = arith.constant 0 : i32
    %c0_i32_0 = arith.constant 0 : i32
    %c0_i32_1 = arith.constant 0 : i32
    return %c0_i32, %c0_i32_0 : i32, i32
  }
  func.func @transform_5(%arg0: i32) -> (i32, i32) {
    %c0_i32 = arith.constant 0 : i32
    %c0_i32_0 = arith.constant 0 : i32
    %c0_i32_1 = arith.constant 0 : i32
    return %c0_i32, %c0_i32_0 : i32, i32
  }
  func.func @transform_6(%arg0: i32) -> (i32, i32, i32) {
    %c0_i32 = arith.constant 0 : i32
    %c0_i32_0 = arith.constant 0 : i32
    %c0_i32_1 = arith.constant 0 : i32
    %c0_i32_2 = arith.constant 0 : i32
    return %c0_i32, %c0_i32_0, %c0_i32_1 : i32, i32, i32
  }
}

</mosaic_0001>

<llo_original>
// kernel: tpu_custom_call.1
$region0: #{tpu_custom_call.1}
  #allocation0 [shape = 'u32[]', space=smem, size = 0x4, offset = 0x4, fixed_abs, tag = 'smem constant byte address 0x4 - core index']
  #allocation1 [shape = 'u32[144,128]{1,0:T(1,128)}', space=vmem, size = 0x12000, scoped, tag = 'internal scratch']
  %s0 = inlined_call_operand.hbm [shape: bf16[32,96], index: 0, kind: input, shape index: {}]
  %s1 = inlined_call_operand.hbm [shape: f32[16,16], index: 1, kind: input, shape index: {}]
  %s2 = inlined_call_operand.hbm [shape: bf16[96,96], index: 2, kind: input, shape index: {}]
  %s3 = inlined_call_operand.vmem [shape: f32[1,96], index: 3, kind: input, shape index: {}]
  %s4 = inlined_call_operand.hbm [shape: bf16[32,128], index: 4, kind: input, shape index: {}]
  %s5 = inlined_call_operand.vmem [shape: f32[1,128], index: 5, kind: input, shape index: {}]
  %s6 = inlined_call_operand.hbm [shape: f32[2,16,128], index: 6, kind: output, shape index: {}]
  %s7 = sld [smem:[#allocation0]]
  $region50: #{tpu_custom_call.1} parent=0
    _
  %s9 = ssub.s32 1, %s7
  %s10 = scalar_select 0, %s9, %s7
  $region1: #{tpu_custom_call.1} parent=0
    #allocation2 [shape = 'u8[8192]{0}', space=vmem, size = 0x2000, scoped, tag = 'input window, operand 0, single buffered']
    #allocation3 [shape = 's32[1]{0}', space=sflag, size = 0x4, scoped, tag = 'scoped memory for tpu_custom_call.1']
    #allocation4 [shape = 's32[1]{0}', space=sflag, size = 0x4, scoped, tag = 'scoped memory for tpu_custom_call.1']
    #allocation5 [shape = 'u8[8192]{0}', space=vmem, size = 0x2000, scoped, tag = 'input window, operand 1, single buffered']
    #allocation6 [shape = 's32[1]{0}', space=sflag, size = 0x4, scoped, tag = 'scoped memory for tpu_custom_call.1']
    #allocation7 [shape = 'u8[24576]{0}', space=vmem, size = 0x6000, scoped, tag = 'input window, operand 2, single buffered']
    #allocation8 [shape = 'u8[8192]{0}', space=vmem, size = 0x2000, scoped, tag = 'input window, operand 4, single buffered']
    #allocation9 [shape = 's32[1]{0}', space=sflag, size = 0x4, scoped, tag = 'scoped memory for tpu_custom_call.1']
    #allocation10 [shape = 'u8[16384]{0}', space=vmem, size = 0x4000, scoped, tag = 'output window, operand 0, single buffered']
    %11 = vsyncpa [#allocation3], 0
    %12 = vsyncpa [#allocation6], 0
    %13 = vsyncpa [#allocation9], 0
    %14 = vsyncpa [#allocation4], 0
    // Predicated region
    $region2: #{tpu_custom_call.1} parent=1 // pred_check
      _
    $region3: #{tpu_custom_call.1} parent=1 // pred_check_branch
      %16 = sbr.rel (0) target = $region5
    $region4: #{tpu_custom_call.1} parent=1 // pred_region
      %s18 = ssub.s32 256, 256
      %19 = vsyncadd [#allocation3], %s18
      %s20 = sshll.u32 [#allocation2], 4
      %s21 = int_to_ptr.vmem [resolvable:$true] %s20
      %26 = dma.hbm_to_vmem [thread:$0]  %s0, 256, %s21, [#allocation3], 64, 64, 4
    $region5: #{tpu_custom_call.1} parent=1 // pred_fallthru
      _
    // Predicated region
    $region6: #{tpu_custom_call.1} parent=1 // pred_check
      _
    $region7: #{tpu_custom_call.1} parent=1 // pred_check_branch
      %28 = sbr.rel (0) target = $region9
    $region8: #{tpu_custom_call.1} parent=1 // pred_region
      %s30 = ssub.s32 256, 256
      %31 = vsyncadd [#allocation6], %s30
      %s32 = sshll.u32 [#allocation5], 4
      %s33 = int_to_ptr.vmem [resolvable:$true] %s32
      %38 = dma.hbm_to_vmem [thread:$0]  %s1, 256, %s33, [#allocation6], 128, 128, 8
    $region9: #{tpu_custom_call.1} parent=1 // pred_fallthru
      _
    // Predicated region
    $region10: #{tpu_custom_call.1} parent=1 // pred_check
      _
    $region11: #{tpu_custom_call.1} parent=1 // pred_check_branch
      %40 = sbr.rel (0) target = $region13
    $region12: #{tpu_custom_call.1} parent=1 // pred_region
      %s42 = ssub.s32 768, 768
      %43 = vsyncadd [#allocation6], %s42
      %s44 = sshll.u32 [#allocation7], 4
      %s45 = int_to_ptr.vmem [resolvable:$true] %s44
      %50 = dma.hbm_to_vmem [thread:$0]  %s2, 768, %s45, [#allocation6], 64, 64, 4
    $region13: #{tpu_custom_call.1} parent=1 // pred_fallthru
      _
    // Predicated region
    $region14: #{tpu_custom_call.1} parent=1 // pred_check
      _
    $region15: #{tpu_custom_call.1} parent=1 // pred_check_branch
      %52 = sbr.rel (0) target = $region17
    $region16: #{tpu_custom_call.1} parent=1 // pred_region
      _
    $region17: #{tpu_custom_call.1} parent=1 // pred_fallthru
      _
    // Predicated region
    $region18: #{tpu_custom_call.1} parent=1 // pred_check
      _
    $region19: #{tpu_custom_call.1} parent=1 // pred_check_branch
      %54 = sbr.rel (0) target = $region21
    $region20: #{tpu_custom_call.1} parent=1 // pred_region
      %s56 = ssub.s32 256, 256
      %57 = vsyncadd [#allocation9], %s56
      %s58 = sshll.u32 [#allocation8], 4
      %s59 = int_to_ptr.vmem [resolvable:$true] %s58
      %64 = dma.hbm_to_vmem [thread:$0]  %s4, 256, %s59, [#allocation9], 64, 64, 4
    $region21: #{tpu_custom_call.1} parent=1 // pred_fallthru
      _
    // Predicated region
    $region22: #{tpu_custom_call.1} parent=1 // pred_check
      _
    $region23: #{tpu_custom_call.1} parent=1 // pred_check_branch
      %66 = sbr.rel (0) target = $region25
    $region24: #{tpu_custom_call.1} parent=1 // pred_region
      _
    $region25: #{tpu_custom_call.1} parent=1 // pred_fallthru
      _
    // Predicated region
    $region26: #{tpu_custom_call.1} parent=1 // pred_check
      _
    $region27: #{tpu_custom_call.1} parent=1 // pred_check_branch
      %68 = sbr.rel (0) target = $region29
    $region28: #{tpu_custom_call.1} parent=1 // pred_region
      %69 = dma.done [#allocation3], 256
    $region29: #{tpu_custom_call.1} parent=1 // pred_fallthru
      _
    // Predicated region
    $region30: #{tpu_custom_call.1} parent=1 // pred_check
      _
    $region31: #{tpu_custom_call.1} parent=1 // pred_check_branch
      %71 = sbr.rel (0) target = $region33
    $region32: #{tpu_custom_call.1} parent=1 // pred_region
      %72 = dma.done [#allocation6], 256
    $region33: #{tpu_custom_call.1} parent=1 // pred_fallthru
      _
    // Predicated region
    $region34: #{tpu_custom_call.1} parent=1 // pred_check
      _
    $region35: #{tpu_custom_call.1} parent=1 // pred_check_branch
      %74 = sbr.rel (0) target = $region37
    $region36: #{tpu_custom_call.1} parent=1 // pred_region
      %75 = dma.done [#allocation6], 768
    $region37: #{tpu_custom_call.1} parent=1 // pred_fallthru
      _
    // Predicated region
    $region38: #{tpu_custom_call.1} parent=1 // pred_check
      _
    $region39: #{tpu_custom_call.1} parent=1 // pred_check_branch
      %77 = sbr.rel (0) target = $region41
    $region40: #{tpu_custom_call.1} parent=1 // pred_region
      %78 = dma.done [#allocation9], 256
    $region41: #{tpu_custom_call.1} parent=1 // pred_fallthru
      _
    %v80 = vld [vmem:[#allocation2] sm:$0xf]
    %v81 = vld [vmem:[#allocation2 + $0x4] sm:$0xf]
    %v82 = vld [vmem:[#allocation2 + $0x8] sm:$0xf]
    %v83 = vld [vmem:[#allocation2 + $0xc] sm:$0xf]
    %v84 = vld [vmem:[#allocation7] sm:$0xf]
    %v85 = vld [vmem:[#allocation7 + $0x4] sm:$0xf]
    %v86 = vld [vmem:[#allocation7 + $0x8] sm:$0xf]
    %v87 = vld [vmem:[#allocation7 + $0xc] sm:$0xf]
    %v88 = vld [vmem:[#allocation7 + $0x10] sm:$0xf]
    %v89 = vld [vmem:[#allocation7 + $0x14] sm:$0xf]
    %v90 = vld [vmem:[#allocation7 + $0x18] sm:$0xf]
    %v91 = vld [vmem:[#allocation7 + $0x1c] sm:$0xf]
    %v92 = vld [vmem:[#allocation7 + $0x20] sm:$0xf]
    %v93 = vld [vmem:[#allocation7 + $0x24] sm:$0xf]
    %v94 = vld [vmem:[#allocation7 + $0x28] sm:$0xf]
    %v95 = vld [vmem:[#allocation7 + $0x2c] sm:$0xf]
    %v96 = vld [vmem:[%s3] sm:$0x1]
    %v98 = vlaneseq
    %v99 = vshrl.u32 %v98, 7
    %v100 = vsub.s32 0, %v99
    %v101 = vrot.slane %v96, %v100
    %v107 = vunpack.c.l.b16 %v80
    %v108 = vunpack.c.l.b16 %v81
    %v109 = vunpack.c.l.b16 %v82
    %v110 = vunpack.c.l.b16 %v83
    %v111 = vpack.c.b16 %v108, %v107
    %v112 = vpack.c.b16 %v110, %v109
    %v125 = vunpack.c.l.b16 %v84
    %v126 = vunpack.c.l.b16 %v85
    %v127 = vunpack.c.l.b16 %v86
    %v128 = vunpack.c.l.b16 %v87
    %v129 = vunpack.c.l.b16 %v88
    %v130 = vunpack.c.l.b16 %v89
    %v131 = vunpack.c.l.b16 %v90
    %v132 = vunpack.c.l.b16 %v91
    %v133 = vunpack.c.l.b16 %v92
    %v134 = vunpack.c.l.b16 %v93
    %v135 = vunpack.c.l.b16 %v94
    %v136 = vunpack.c.l.b16 %v95
    %v137 = vpack.c.b16 %v126, %v125
    %v138 = vpack.c.b16 %v128, %v127
    %v139 = vpack.c.b16 %v130, %v129
    %v140 = vpack.c.b16 %v132, %v131
    %v141 = vpack.c.b16 %v134, %v133
    %v142 = vpack.c.b16 %v136, %v135
    %vm149 = vcmask 785408
    %v151 = vsel %vm149, %v111, 0
    %v154 = vsel %vm149, %v112, 0
    %156 = vmatprep.subr.bf16.mxu0 0
    %157 = vmatpush1.bf16.msra.mxu0 0
    %158 = vmatprep.subr.bf16.mxu0 0
    %159 = vmatpush1.bf16.msra.mxu0 0
    %160 = vmatprep.subr.bf16.mxu0 0
    %161 = vmatpush1.bf16.msra.mxu0 %v142
    %162 = vmatprep.subr.bf16.mxu0 0
    %163 = vmatpush1.bf16.msra.mxu0 %v141
    %164 = vmatprep.subr.bf16.mxu0 0
    %165 = vmatpush1.bf16.msra.mxu0 %v140
    %166 = vmatprep.subr.bf16.mxu0 0
    %167 = vmatpush1.bf16.msra.mxu0 %v139
    %168 = vmatprep.subr.bf16.mxu0 0
    %169 = vmatpush1.bf16.msra.mxu0 %v138
    %170 = vmatprep.subr.bf16.mxu0 0
    %171 = vmatpush1.bf16.msra.mxu0 %v137
    %172 = vmatprep.subr.bf16.mxu0 0
    %173 = vmatpush2.bf16.msra.mxu0 0
    %174 = vmatprep.subr.bf16.mxu0 0
    %175 = vmatpush2.bf16.msra.mxu0 0
    %176 = vmatprep.subr.bf16.mxu0 0
    %177 = vmatpush2.bf16.msra.mxu0 0
    %178 = vmatprep.subr.bf16.mxu0 0
    %179 = vmatpush2.bf16.msra.mxu0 0
    %180 = vmatprep.subr.bf16.mxu0 0
    %181 = vmatpush2.bf16.msra.mxu0 0
    %182 = vmatprep.subr.bf16.mxu0 0
    %183 = vmatpush2.bf16.msra.mxu0 0
    %184 = vmatprep.subr.bf16.mxu0 0
    %185 = vmatpush2.bf16.msra.mxu0 0
    %186 = vmatprep.subr.bf16.mxu0 0
    %187 = vmatpush2.bf16.msra.mxu0 0
    %188 = vmatprep.mubr.bf16.mxu0 0
    %189 = vmatmul.mubr.bf16.gmra.mxu0 %v151
    %v190 = vpop.f32.mrf.mxu0
    %v191 = vadd.f32 %v101, %v190
    %v192 = vpop.f32.mrf.mxu0
    %v193 = vpop.f32.mrf.mxu0
    %v194 = vadd.f32 %v101, %v193
    %v195 = vpop.f32.mrf.mxu0
    %196 = vmatprep.mubr.bf16.mxu0 0
    %197 = vmatmul.mubr.bf16.gmra.mxu0 %v154
    %v198 = vpop.f32.mrf.mxu0
    %v199 = vadd.f32 %v101, %v198
    %v200 = vpop.f32.mrf.mxu0
    %v201 = vpop.f32.mrf.mxu0
    %v202 = vadd.f32 %v101, %v201
    %v203 = vpop.f32.mrf.mxu0
    %204 = vdwg.mxu0
    %v205 = vld [vmem:[#allocation5] sm:$0xff]
    %v206 = vld [vmem:[#allocation5 + $0x8] sm:$0xff]
    %v207 = vld [vmem:[#allocation8] sm:$0xf]
    %v208 = vld [vmem:[#allocation8 + $0x4] sm:$0xf]
    %v209 = vld [vmem:[#allocation8 + $0x8] sm:$0xf]
    %v210 = vld [vmem:[#allocation8 + $0xc] sm:$0xf]
    %v211 = vld [vmem:[%s5] sm:$0x1]
    %v212 = vpack.c.bf16 %v194, %v191
    %214 = vrot.lane.b32.xlu0 %v212, 96
    %v215 = vpop.permute.xlu0 %214
    %vm216 = vcmask 64512
    %v218 = vsel %vm216, %v212, 0
    %v221 = vsel %vm216, %v215, 0
    %223 = vmatprep.subr.bf16.mxu0 0
    %224 = vmatpush1.bf16.xpose.msra.mxu0 0
    %225 = vmatprep.subr.bf16.mxu0 0
    %226 = vmatpush1.bf16.xpose.msra.mxu0 0
    %227 = vmatprep.subr.bf16.mxu0 0
    %228 = vmatpush1.bf16.xpose.msra.mxu0 0
    %229 = vmatprep.subr.bf16.mxu0 0
    %230 = vmatpush1.bf16.xpose.msra.mxu0 0
    %231 = vmatprep.subr.bf16.mxu0 0
    %232 = vmatpush1.bf16.xpose.msra.mxu0 0
    %233 = vmatprep.subr.bf16.mxu0 0
    %234 = vmatpush1.bf16.xpose.msra.mxu0 0
    %235 = vmatprep.subr.bf16.mxu0 0
    %236 = vmatpush1.bf16.xpose.msra.mxu0 0
    %237 = vmatprep.subr.bf16.mxu0 0
    %238 = vmatpush1.bf16.xpose.msra.mxu0 %v221
    %239 = vmatprep.subr.bf16.mxu0 0
    %240 = vmatpush2.bf16.xpose.msra.mxu0 0
    %241 = vmatprep.subr.bf16.mxu0 0
    %242 = vmatpush2.bf16.xpose.msra.mxu0 0
    %243 = vmatprep.subr.bf16.mxu0 0
    %244 = vmatpush2.bf16.xpose.msra.mxu0 0
    %245 = vmatprep.subr.bf16.mxu0 0
    %246 = vmatpush2.bf16.xpose.msra.mxu0 0
    %247 = vmatprep.subr.bf16.mxu0 0
    %248 = vmatpush2.bf16.xpose.msra.mxu0 0
    %249 = vmatprep.subr.bf16.mxu0 0
    %250 = vmatpush2.bf16.xpose.msra.mxu0 0
    %251 = vmatprep.subr.bf16.mxu0 0
    %252 = vmatpush2.bf16.xpose.msra.mxu0 0
    %253 = vmatprep.subr.bf16.mxu0 0
    %254 = vmatpush2.bf16.xpose.msra.mxu0 0
    %255 = vmatprep.mubr.bf16.mxu0 0
    %256 = vmatmul.mubr.bf16.gmra.mxu0 %v218
    %v257 = vpop.f32.mrf.mxu0
    %v258 = vadd.f32 %v205, %v257
    %v259 = vpop.f32.mrf.mxu0
    %v260 = vpop.f32.mrf.mxu0
    %v261 = vadd.f32 %v206, %v260
    %v262 = vpop.f32.mrf.mxu0
    %263 = vdwg.mxu0
    %vm264 = vcmask 130048
    %v265 = vsel %vm264, %v258, -inf
    %266 = vmax.xlane.f32.xlu0 %v265
    %v267 = vpop.xlane.xlu0 %266
    %v268 = vsel %vm264, %v261, -inf
    %269 = vmax.xlane.f32.xlu0 %v268
    %v270 = vpop.xlane.xlu0 %269
    %v271 = vsub.f32 %v258, %v267
    %v272 = vsub.f32 %v261, %v270
    %v273 = vmul.f32 %v271, 1.442695
    %v274 = vpow.pop %v273
    %v275 = vmul.f32 %v272, 1.442695
    %v276 = vpow.pop %v275
    %v277 = vsel %vm264, %v274, 0.0
    %278 = vadd.xlane.f32.xlu0 %v277
    %v279 = vpop.xlane.xlu0 %278
    %v280 = vsel %vm264, %v276, 0.0
    %281 = vadd.xlane.f32.xlu0 %v280
    %v282 = vpop.xlane.xlu0 %281
    %v283 = vrcp.pop %v279
    %v284 = vrcp.pop %v282
    %v285 = vmul.f32 %v274, %v283
    %v286 = vmul.f32 %v276, %v284
    %v287 = vpack.c.bf16 %v286, %v285
    %288 = vrot.lane.b32.xlu0 %v212, 64
    %v289 = vpop.permute.xlu0 %288
    %v292 = vsel %vm264, %v287, 0
    %294 = vmatprep.subr.bf16.mxu0 0
    %295 = vmatpush1.bf16.msra.mxu0 0
    %296 = vmatprep.subr.bf16.mxu0 0
    %297 = vmatpush1.bf16.msra.mxu0 0
    %298 = vmatprep.subr.bf16.mxu0 0
    %299 = vmatpush1.bf16.msra.mxu0 0
    %300 = vmatprep.subr.bf16.mxu0 0
    %301 = vmatpush1.bf16.msra.mxu0 0
    %302 = vmatprep.subr.bf16.mxu0 0
    %303 = vmatpush1.bf16.msra.mxu0 0
    %304 = vmatprep.subr.bf16.mxu0 0
    %305 = vmatpush1.bf16.msra.mxu0 0
    %306 = vmatprep.subr.bf16.mxu0 0
    %307 = vmatpush1.bf16.msra.mxu0 0
    %308 = vmatprep.subr.bf16.mxu0 0
    %309 = vmatpush1.bf16.msra.mxu0 %v289
    %310 = vmatprep.subr.bf16.mxu0 0
    %311 = vmatpush2.bf16.msra.mxu0 0
    %312 = vmatprep.subr.bf16.mxu0 0
    %313 = vmatpush2.bf16.msra.mxu0 0
    %314 = vmatprep.subr.bf16.mxu0 0
    %315 = vmatpush2.bf16.msra.mxu0 0
    %316 = vmatprep.subr.bf16.mxu0 0
    %317 = vmatpush2.bf16.msra.mxu0 0
    %318 = vmatprep.subr.bf16.mxu0 0
    %319 = vmatpush2.bf16.msra.mxu0 0
    %320 = vmatprep.subr.bf16.mxu0 0
    %321 = vmatpush2.bf16.msra.mxu0 0
    %322 = vmatprep.subr.bf16.mxu0 0
    %323 = vmatpush2.bf16.msra.mxu0 0
    %324 = vmatprep.subr.bf16.mxu0 0
    %325 = vmatpush2.bf16.msra.mxu0 0
    %326 = vmatprep.mubr.bf16.mxu0 0
    %327 = vmatmul.mubr.bf16.gmra.mxu0 %v292
    %v328 = vpop.f32.mrf.mxu0
    %v329 = vadd.f32 0.0, %v328
    %v330 = vpop.f32.mrf.mxu0
    %v331 = vpop.f32.mrf.mxu0
    %v332 = vadd.f32 0.0, %v331
    %v333 = vpop.f32.mrf.mxu0
    %334 = vdwg.mxu0
    %335 = vrot.lane.b32.xlu0 %v212, 120
    %v336 = vpop.permute.xlu0 %335
    %337 = vrot.lane.b32.xlu0 %v212, 88
    %v338 = vpop.permute.xlu0 %337
    %v340 = vsel %vm216, %v336, 0
    %v343 = vsel %vm216, %v338, 0
    %345 = vmatprep.subr.bf16.mxu0 0
    %346 = vmatpush1.bf16.xpose.msra.mxu0 0
    %347 = vmatprep.subr.bf16.mxu0 0
    %348 = vmatpush1.bf16.xpose.msra.mxu0 0
    %349 = vmatprep.subr.bf16.mxu0 0
    %350 = vmatpush1.bf16.xpose.msra.mxu0 0
    %351 = vmatprep.subr.bf16.mxu0 0
    %352 = vmatpush1.bf16.xpose.msra.mxu0 0
    %353 = vmatprep.subr.bf16.mxu0 0
    %354 = vmatpush1.bf16.xpose.msra.mxu0 0
    %355 = vmatprep.subr.bf16.mxu0 0
    %356 = vmatpush1.bf16.xpose.msra.mxu0 0
    %357 = vmatprep.subr.bf16.mxu0 0
    %358 = vmatpush1.bf16.xpose.msra.mxu0 0
    %359 = vmatprep.subr.bf16.mxu0 0
    %360 = vmatpush1.bf16.xpose.msra.mxu0 %v343
    %361 = vmatprep.subr.bf16.mxu0 0
    %362 = vmatpush2.bf16.xpose.msra.mxu0 0
    %363 = vmatprep.subr.bf16.mxu0 0
    %364 = vmatpush2.bf16.xpose.msra.mxu0 0
    %365 = vmatprep.subr.bf16.mxu0 0
    %366 = vmatpush2.bf16.xpose.msra.mxu0 0
    %367 = vmatprep.subr.bf16.mxu0 0
    %368 = vmatpush2.bf16.xpose.msra.mxu0 0
    %369 = vmatprep.subr.bf16.mxu0 0
    %370 = vmatpush2.bf16.xpose.msra.mxu0 0
    %371 = vmatprep.subr.bf16.mxu0 0
    %372 = vmatpush2.bf16.xpose.msra.mxu0 0
    %373 = vmatprep.subr.bf16.mxu0 0
    %374 = vmatpush2.bf16.xpose.msra.mxu0 0
    %375 = vmatprep.subr.bf16.mxu0 0
    %376 = vmatpush2.bf16.xpose.msra.mxu0 0
    %377 = vmatprep.mubr.bf16.mxu0 0
    %378 = vmatmul.mubr.bf16.gmra.mxu0 %v340
    %v379 = vpop.f32.mrf.mxu0
    %v380 = vadd.f32 %v205, %v379
    %v381 = vpop.f32.mrf.mxu0
    %v382 = vpop.f32.mrf.mxu0
    %v383 = vadd.f32 %v206, %v382
    %v384 = vpop.f32.mrf.mxu0
    %385 = vdwg.mxu0
    %v386 = vsel %vm264, %v380, -inf
    %387 = vmax.xlane.f32.xlu0 %v386
    %v388 = vpop.xlane.xlu0 %387
    %v389 = vsel %vm264, %v383, -inf
    %390 = vmax.xlane.f32.xlu0 %v389
    %v391 = vpop.xlane.xlu0 %390
    %v392 = vsub.f32 %v380, %v388
    %v393 = vsub.f32 %v383, %v391
    %v394 = vmul.f32 %v392, 1.442695
    %v395 = vpow.pop %v394
    %v396 = vmul.f32 %v393, 1.442695
    %v397 = vpow.pop %v396
    %v398 = vsel %vm264, %v395, 0.0
    %399 = vadd.xlane.f32.xlu0 %v398
    %v400 = vpop.xlane.xlu0 %399
    %v401 = vsel %vm264, %v397, 0.0
    %402 = vadd.xlane.f32.xlu0 %v401
    %v403 = vpop.xlane.xlu0 %402
    %v404 = vrcp.pop %v400
    %v405 = vrcp.pop %v403
    %v406 = vmul.f32 %v395, %v404
    %v407 = vmul.f32 %v397, %v405
    %v408 = vpack.c.bf16 %v407, %v406
    %409 = vrot.lane.b32.xlu0 %v212, 56
    %v410 = vpop.permute.xlu0 %409
    %v413 = vsel %vm264, %v408, 0
    %415 = vmatprep.subr.bf16.mxu0 0
    %416 = vmatpush1.bf16.msra.mxu0 0
    %417 = vmatprep.subr.bf16.mxu0 0
    %418 = vmatpush1.bf16.msra.mxu0 0
    %419 = vmatprep.subr.bf16.mxu0 0
    %420 = vmatpush1.bf16.msra.mxu0 0
    %421 = vmatprep.subr.bf16.mxu0 0
    %422 = vmatpush1.bf16.msra.mxu0 0
    %423 = vmatprep.subr.bf16.mxu0 0
    %424 = vmatpush1.bf16.msra.mxu0 0
    %425 = vmatprep.subr.bf16.mxu0 0
    %426 = vmatpush1.bf16.msra.mxu0 0
    %427 = vmatprep.subr.bf16.mxu0 0
    %428 = vmatpush1.bf16.msra.mxu0 0
    %429 = vmatprep.subr.bf16.mxu0 0
    %430 = vmatpush1.bf16.msra.mxu0 %v410
    %431 = vmatprep.subr.bf16.mxu0 0
    %432 = vmatpush2.bf16.msra.mxu0 0
    %433 = vmatprep.subr.bf16.mxu0 0
    %434 = vmatpush2.bf16.msra.mxu0 0
    %435 = vmatprep.subr.bf16.mxu0 0
    %436 = vmatpush2.bf16.msra.mxu0 0
    %437 = vmatprep.subr.bf16.mxu0 0
    %438 = vmatpush2.bf16.msra.mxu0 0
    %439 = vmatprep.subr.bf16.mxu0 0
    %440 = vmatpush2.bf16.msra.mxu0 0
    %441 = vmatprep.subr.bf16.mxu0 0
    %442 = vmatpush2.bf16.msra.mxu0 0
    %443 = vmatprep.subr.bf16.mxu0 0
    %444 = vmatpush2.bf16.msra.mxu0 0
    %445 = vmatprep.subr.bf16.mxu0 0
    %446 = vmatpush2.bf16.msra.mxu0 0
    %447 = vmatprep.mubr.bf16.mxu0 0
    %448 = vmatmul.mubr.bf16.gmra.mxu0 %v413
    %v449 = vpop.f32.mrf.mxu0
    %v450 = vadd.f32 0.0, %v449
    %v451 = vpop.f32.mrf.mxu0
    %v452 = vpop.f32.mrf.mxu0
    %v453 = vadd.f32 0.0, %v452
    %v454 = vpop.f32.mrf.mxu0
    %455 = vdwg.mxu0
    %456 = vrot.lane.b32.xlu0 %v212, 112
    %v457 = vpop.permute.xlu0 %456
    %458 = vrot.lane.b32.xlu0 %v212, 80
    %v459 = vpop.permute.xlu0 %458
    %v461 = vsel %vm216, %v457, 0
    %v464 = vsel %vm216, %v459, 0
    %466 = vmatprep.subr.bf16.mxu0 0
    %467 = vmatpush1.bf16.xpose.msra.mxu0 0
    %468 = vmatprep.subr.bf16.mxu0 0
    %469 = vmatpush1.bf16.xpose.msra.mxu0 0
    %470 = vmatprep.subr.bf16.mxu0 0
    %471 = vmatpush1.bf16.xpose.msra.mxu0 0
    %472 = vmatprep.subr.bf16.mxu0 0
    %473 = vmatpush1.bf16.xpose.msra.mxu0 0
    %474 = vmatprep.subr.bf16.mxu0 0
    %475 = vmatpush1.bf16.xpose.msra.mxu0 0
    %476 = vmatprep.subr.bf16.mxu0 0
    %477 = vmatpush1.bf16.xpose.msra.mxu0 0
    %478 = vmatprep.subr.bf16.mxu0 0
    %479 = vmatpush1.bf16.xpose.msra.mxu0 0
    %480 = vmatprep.subr.bf16.mxu0 0
    %481 = vmatpush1.bf16.xpose.msra.mxu0 %v464
    %482 = vmatprep.subr.bf16.mxu0 0
    %483 = vmatpush2.bf16.xpose.msra.mxu0 0
    %484 = vmatprep.subr.bf16.mxu0 0
    %485 = vmatpush2.bf16.xpose.msra.mxu0 0
    %486 = vmatprep.subr.bf16.mxu0 0
    %487 = vmatpush2.bf16.xpose.msra.mxu0 0
    %488 = vmatprep.subr.bf16.mxu0 0
    %489 = vmatpush2.bf16.xpose.msra.mxu0 0
    %490 = vmatprep.subr.bf16.mxu0 0
    %491 = vmatpush2.bf16.xpose.msra.mxu0 0
    %492 = vmatprep.subr.bf16.mxu0 0
    %493 = vmatpush2.bf16.xpose.msra.mxu0 0
    %494 = vmatprep.subr.bf16.mxu0 0
    %495 = vmatpush2.bf16.xpose.msra.mxu0 0
    %496 = vmatprep.subr.bf16.mxu0 0
    %497 = vmatpush2.bf16.xpose.msra.mxu0 0
    %498 = vmatprep.mubr.bf16.mxu0 0
    %499 = vmatmul.mubr.bf16.gmra.mxu0 %v461
    %v500 = vpop.f32.mrf.mxu0
    %v501 = vadd.f32 %v205, %v500
    %v502 = vpop.f32.mrf.mxu0
    %v503 = vpop.f32.mrf.mxu0
    %v504 = vadd.f32 %v206, %v503
    %v505 = vpop.f32.mrf.mxu0
    %506 = vdwg.mxu0
    %v507 = vsel %vm264, %v501, -inf
    %508 = vmax.xlane.f32.xlu0 %v507
    %v509 = vpop.xlane.xlu0 %508
    %v510 = vsel %vm264, %v504, -inf
    %511 = vmax.xlane.f32.xlu0 %v510
    %v512 = vpop.xlane.xlu0 %511
    %v513 = vsub.f32 %v501, %v509
    %v514 = vsub.f32 %v504, %v512
    %v515 = vmul.f32 %v513, 1.442695
    %v516 = vpow.pop %v515
    %v517 = vmul.f32 %v514, 1.442695
    %v518 = vpow.pop %v517
    %v519 = vsel %vm264, %v516, 0.0
    %520 = vadd.xlane.f32.xlu0 %v519
    %v521 = vpop.xlane.xlu0 %520
    %v522 = vsel %vm264, %v518, 0.0
    %523 = vadd.xlane.f32.xlu0 %v522
    %v524 = vpop.xlane.xlu0 %523
    %v525 = vrcp.pop %v521
    %v526 = vrcp.pop %v524
    %v527 = vmul.f32 %v516, %v525
    %v528 = vmul.f32 %v518, %v526
    %v529 = vpack.c.bf16 %v528, %v527
    %530 = vrot.lane.b32.xlu0 %v212, 48
    %v531 = vpop.permute.xlu0 %530
    %v534 = vsel %vm264, %v529, 0
    %536 = vmatprep.subr.bf16.mxu0 0
    %537 = vmatpush1.bf16.msra.mxu0 0
    %538 = vmatprep.subr.bf16.mxu0 0
    %539 = vmatpush1.bf16.msra.mxu0 0
    %540 = vmatprep.subr.bf16.mxu0 0
    %541 = vmatpush1.bf16.msra.mxu0 0
    %542 = vmatprep.subr.bf16.mxu0 0
    %543 = vmatpush1.bf16.msra.mxu0 0
    %544 = vmatprep.subr.bf16.mxu0 0
    %545 = vmatpush1.bf16.msra.mxu0 0
    %546 = vmatprep.subr.bf16.mxu0 0
    %547 = vmatpush1.bf16.msra.mxu0 0
    %548 = vmatprep.subr.bf16.mxu0 0
    %549 = vmatpush1.bf16.msra.mxu0 0
    %550 = vmatprep.subr.bf16.mxu0 0
    %551 = vmatpush1.bf16.msra.mxu0 %v531
    %552 = vmatprep.subr.bf16.mxu0 0
    %553 = vmatpush2.bf16.msra.mxu0 0
    %554 = vmatprep.subr.bf16.mxu0 0
    %555 = vmatpush2.bf16.msra.mxu0 0
    %556 = vmatprep.subr.bf16.mxu0 0
    %557 = vmatpush2.bf16.msra.mxu0 0
    %558 = vmatprep.subr.bf16.mxu0 0
    %559 = vmatpush2.bf16.msra.mxu0 0
    %560 = vmatprep.subr.bf16.mxu0 0
    %561 = vmatpush2.bf16.msra.mxu0 0
    %562 = vmatprep.subr.bf16.mxu0 0
    %563 = vmatpush2.bf16.msra.mxu0 0
    %564 = vmatprep.subr.bf16.mxu0 0
    %565 = vmatpush2.bf16.msra.mxu0 0
    %566 = vmatprep.subr.bf16.mxu0 0
    %567 = vmatpush2.bf16.msra.mxu0 0
    %568 = vmatprep.mubr.bf16.mxu0 0
    %569 = vmatmul.mubr.bf16.gmra.mxu0 %v534
    %v570 = vpop.f32.mrf.mxu0
    %v571 = vadd.f32 0.0, %v570
    %v572 = vpop.f32.mrf.mxu0
    %v573 = vpop.f32.mrf.mxu0
    %v574 = vadd.f32 0.0, %v573
    %v575 = vpop.f32.mrf.mxu0
    %576 = vdwg.mxu0
    %577 = vrot.lane.b32.xlu0 %v212, 104
    %v578 = vpop.permute.xlu0 %577
    %579 = vrot.lane.b32.xlu0 %v212, 72
    %v580 = vpop.permute.xlu0 %579
    %v582 = vsel %vm216, %v578, 0
    %v585 = vsel %vm216, %v580, 0
    %587 = vmatprep.subr.bf16.mxu0 0
    %588 = vmatpush1.bf16.xpose.msra.mxu0 0
    %589 = vmatprep.subr.bf16.mxu0 0
    %590 = vmatpush1.bf16.xpose.msra.mxu0 0
    %591 = vmatprep.subr.bf16.mxu0 0
    %592 = vmatpush1.bf16.xpose.msra.mxu0 0
    %593 = vmatprep.subr.bf16.mxu0 0
    %594 = vmatpush1.bf16.xpose.msra.mxu0 0
    %595 = vmatprep.subr.bf16.mxu0 0
    %596 = vmatpush1.bf16.xpose.msra.mxu0 0
    %597 = vmatprep.subr.bf16.mxu0 0
    %598 = vmatpush1.bf16.xpose.msra.mxu0 0
    %599 = vmatprep.subr.bf16.mxu0 0
    %600 = vmatpush1.bf16.xpose.msra.mxu0 0
    %601 = vmatprep.subr.bf16.mxu0 0
    %602 = vmatpush1.bf16.xpose.msra.mxu0 %v585
    %603 = vmatprep.subr.bf16.mxu0 0
    %604 = vmatpush2.bf16.xpose.msra.mxu0 0
    %605 = vmatprep.subr.bf16.mxu0 0
    %606 = vmatpush2.bf16.xpose.msra.mxu0 0
    %607 = vmatprep.subr.bf16.mxu0 0
    %608 = vmatpush2.bf16.xpose.msra.mxu0 0
    %609 = vmatprep.subr.bf16.mxu0 0
    %610 = vmatpush2.bf16.xpose.msra.mxu0 0
    %611 = vmatprep.subr.bf16.mxu0 0
    %612 = vmatpush2.bf16.xpose.msra.mxu0 0
    %613 = vmatprep.subr.bf16.mxu0 0
    %614 = vmatpush2.bf16.xpose.msra.mxu0 0
    %615 = vmatprep.subr.bf16.mxu0 0
    %616 = vmatpush2.bf16.xpose.msra.mxu0 0
    %617 = vmatprep.subr.bf16.mxu0 0
    %618 = vmatpush2.bf16.xpose.msra.mxu0 0
    %619 = vmatprep.mubr.bf16.mxu0 0
    %620 = vmatmul.mubr.bf16.gmra.mxu0 %v582
    %v621 = vpop.f32.mrf.mxu0
    %v622 = vadd.f32 %v205, %v621
    %v623 = vpop.f32.mrf.mxu0
    %v624 = vpop.f32.mrf.mxu0
    %v625 = vadd.f32 %v206, %v624
    %v626 = vpop.f32.mrf.mxu0
    %627 = vdwg.mxu0
    %v628 = vsel %vm264, %v622, -inf
    %629 = vmax.xlane.f32.xlu0 %v628
    %v630 = vpop.xlane.xlu0 %629
    %v631 = vsel %vm264, %v625, -inf
    %632 = vmax.xlane.f32.xlu0 %v631
    %v633 = vpop.xlane.xlu0 %632
    %v634 = vsub.f32 %v622, %v630
    %v635 = vsub.f32 %v625, %v633
    %v636 = vmul.f32 %v634, 1.442695
    %v637 = vpow.pop %v636
    %v638 = vmul.f32 %v635, 1.442695
    %v639 = vpow.pop %v638
    %v640 = vsel %vm264, %v637, 0.0
    %641 = vadd.xlane.f32.xlu0 %v640
    %v642 = vpop.xlane.xlu0 %641
    %v643 = vsel %vm264, %v639, 0.0
    %644 = vadd.xlane.f32.xlu0 %v643
    %v645 = vpop.xlane.xlu0 %644
    %v646 = vrcp.pop %v642
    %v647 = vrcp.pop %v645
    %v648 = vmul.f32 %v637, %v646
    %v649 = vmul.f32 %v639, %v647
    %v650 = vpack.c.bf16 %v649, %v648
    %651 = vrot.lane.b32.xlu0 %v212, 40
    %v652 = vpop.permute.xlu0 %651
    %v655 = vsel %vm264, %v650, 0
    %657 = vmatprep.subr.bf16.mxu0 0
    %658 = vmatpush1.bf16.msra.mxu0 0
    %659 = vmatprep.subr.bf16.mxu0 0
    %660 = vmatpush1.bf16.msra.mxu0 0
    %661 = vmatprep.subr.bf16.mxu0 0
    %662 = vmatpush1.bf16.msra.mxu0 0
    %663 = vmatprep.subr.bf16.mxu0 0
    %664 = vmatpush1.bf16.msra.mxu0 0
    %665 = vmatprep.subr.bf16.mxu0 0
    %666 = vmatpush1.bf16.msra.mxu0 0
    %667 = vmatprep.subr.bf16.mxu0 0
    %668 = vmatpush1.bf16.msra.mxu0 0
    %669 = vmatprep.subr.bf16.mxu0 0
    %670 = vmatpush1.bf16.msra.mxu0 0
    %671 = vmatprep.subr.bf16.mxu0 0
    %672 = vmatpush1.bf16.msra.mxu0 %v652
    %673 = vmatprep.subr.bf16.mxu0 0
    %674 = vmatpush2.bf16.msra.mxu0 0
    %675 = vmatprep.subr.bf16.mxu0 0
    %676 = vmatpush2.bf16.msra.mxu0 0
    %677 = vmatprep.subr.bf16.mxu0 0
    %678 = vmatpush2.bf16.msra.mxu0 0
    %679 = vmatprep.subr.bf16.mxu0 0
    %680 = vmatpush2.bf16.msra.mxu0 0
    %681 = vmatprep.subr.bf16.mxu0 0
    %682 = vmatpush2.bf16.msra.mxu0 0
    %683 = vmatprep.subr.bf16.mxu0 0
    %684 = vmatpush2.bf16.msra.mxu0 0
    %685 = vmatprep.subr.bf16.mxu0 0
    %686 = vmatpush2.bf16.msra.mxu0 0
    %687 = vmatprep.subr.bf16.mxu0 0
    %688 = vmatpush2.bf16.msra.mxu0 0
    %689 = vmatprep.mubr.bf16.mxu0 0
    %690 = vmatmul.mubr.bf16.gmra.mxu0 %v655
    %v691 = vpop.f32.mrf.mxu0
    %v692 = vadd.f32 0.0, %v691
    %v693 = vpop.f32.mrf.mxu0
    %v694 = vpop.f32.mrf.mxu0
    %v695 = vadd.f32 0.0, %v694
    %v696 = vpop.f32.mrf.mxu0
    %697 = vdwg.mxu0
    %700 = vrot.lane.b32.xlu0 %v450, 8
    %v701 = vpop.permute.xlu0 %700
    %702 = vrot.lane.b32.xlu0 %v453, 8
    %v703 = vpop.permute.xlu0 %702
    %708 = vrot.lane.b32.xlu0 %v571, 16
    %v709 = vpop.permute.xlu0 %708
    %710 = vrot.lane.b32.xlu0 %v574, 16
    %v711 = vpop.permute.xlu0 %710
    %716 = vrot.lane.b32.xlu0 %v692, 24
    %v717 = vpop.permute.xlu0 %716
    %718 = vrot.lane.b32.xlu0 %v695, 24
    %v719 = vpop.permute.xlu0 %718
    %v722 = vsel %vm216, %v329, %v701
    %v723 = vsel %vm216, %v332, %v703
    %v724 = vsel %vm264, %v722, %v709
    %v725 = vsel %vm264, %v723, %v711
    %vm726 = vcmask 195584
    %v727 = vsel %vm726, %v724, %v717
    %v728 = vsel %vm726, %v725, %v719
    %v729 = vpack.c.bf16 %v728, %v727
    %v731 = vlaneseq
    %v732 = vshrl.u32 %v731, 7
    %v733 = vsub.s32 0, %v732
    %v734 = vrot.slane %v211, %v733
    %v740 = vunpack.c.l.b16 %v207
    %v741 = vunpack.c.l.b16 %v208
    %v742 = vunpack.c.l.b16 %v209
    %v743 = vunpack.c.l.b16 %v210
    %v744 = vpack.c.b16 %v741, %v740
    %v745 = vpack.c.b16 %v743, %v742
    %vm748 = vcmask 261120
    %v750 = vsel %vm748, %v729, 0
    %752 = vmatprep.subr.bf16.mxu0 0
    %753 = vmatpush1.bf16.msra.mxu0 0
    %754 = vmatprep.subr.bf16.mxu0 0
    %755 = vmatpush1.bf16.msra.mxu0 0
    %756 = vmatprep.subr.bf16.mxu0 0
    %757 = vmatpush1.bf16.msra.mxu0 0
    %758 = vmatprep.subr.bf16.mxu0 0
    %759 = vmatpush1.bf16.msra.mxu0 0
    %760 = vmatprep.subr.bf16.mxu0 0
    %761 = vmatpush1.bf16.msra.mxu0 0
    %762 = vmatprep.subr.bf16.mxu0 0
    %763 = vmatpush1.bf16.msra.mxu0 0
    %764 = vmatprep.subr.bf16.mxu0 0
    %765 = vmatpush1.bf16.msra.mxu0 %v745
    %766 = vmatprep.subr.bf16.mxu0 0
    %767 = vmatpush1.bf16.msra.mxu0 %v744
    %768 = vmatprep.subr.bf16.mxu0 0
    %769 = vmatpush2.bf16.msra.mxu0 0
    %770 = vmatprep.subr.bf16.mxu0 0
    %771 = vmatpush2.bf16.msra.mxu0 0
    %772 = vmatprep.subr.bf16.mxu0 0
    %773 = vmatpush2.bf16.msra.mxu0 0
    %774 = vmatprep.subr.bf16.mxu0 0
    %775 = vmatpush2.bf16.msra.mxu0 0
    %776 = vmatprep.subr.bf16.mxu0 0
    %777 = vmatpush2.bf16.msra.mxu0 0
    %778 = vmatprep.subr.bf16.mxu0 0
    %779 = vmatpush2.bf16.msra.mxu0 0
    %780 = vmatprep.subr.bf16.mxu0 0
    %781 = vmatpush2.bf16.msra.mxu0 0
    %782 = vmatprep.subr.bf16.mxu0 0
    %783 = vmatpush2.bf16.msra.mxu0 0
    %784 = vmatprep.mubr.bf16.mxu0 0
    %785 = vmatmul.mubr.bf16.gmra.mxu0 %v750
    %v786 = vpop.f32.mrf.mxu0
    %v787 = vadd.f32 %v734, %v786
    %v788 = vpop.f32.mrf.mxu0
    %v789 = vpop.f32.mrf.mxu0
    %v790 = vadd.f32 %v734, %v789
    %v791 = vpop.f32.mrf.mxu0
    %792 = vdwg.mxu0
    %793 = vst [vmem:[#allocation10] sm:$0xff] %v787
    %794 = vst [vmem:[#allocation10 + $0x8] sm:$0xff] %v790
    %v795 = vpack.c.bf16 %v202, %v199
    %797 = vrot.lane.b32.xlu0 %v795, 96
    %v798 = vpop.permute.xlu0 %797
    %v800 = vsel %vm216, %v795, 0
    %v803 = vsel %vm216, %v798, 0
    %805 = vmatprep.subr.bf16.mxu0 0
    %806 = vmatpush1.bf16.xpose.msra.mxu0 0
    %807 = vmatprep.subr.bf16.mxu0 0
    %808 = vmatpush1.bf16.xpose.msra.mxu0 0
    %809 = vmatprep.subr.bf16.mxu0 0
    %810 = vmatpush1.bf16.xpose.msra.mxu0 0
    %811 = vmatprep.subr.bf16.mxu0 0
    %812 = vmatpush1.bf16.xpose.msra.mxu0 0
    %813 = vmatprep.subr.bf16.mxu0 0
    %814 = vmatpush1.bf16.xpose.msra.mxu0 0
    %815 = vmatprep.subr.bf16.mxu0 0
    %816 = vmatpush1.bf16.xpose.msra.mxu0 0
    %817 = vmatprep.subr.bf16.mxu0 0
    %818 = vmatpush1.bf16.xpose.msra.mxu0 0
    %819 = vmatprep.subr.bf16.mxu0 0
    %820 = vmatpush1.bf16.xpose.msra.mxu0 %v803
    %821 = vmatprep.subr.bf16.mxu0 0
    %822 = vmatpush2.bf16.xpose.msra.mxu0 0
    %823 = vmatprep.subr.bf16.mxu0 0
    %824 = vmatpush2.bf16.xpose.msra.mxu0 0
    %825 = vmatprep.subr.bf16.mxu0 0
    %826 = vmatpush2.bf16.xpose.msra.mxu0 0
    %827 = vmatprep.subr.bf16.mxu0 0
    %828 = vmatpush2.bf16.xpose.msra.mxu0 0
    %829 = vmatprep.subr.bf16.mxu0 0
    %830 = vmatpush2.bf16.xpose.msra.mxu0 0
    %831 = vmatprep.subr.bf16.mxu0 0
    %832 = vmatpush2.bf16.xpose.msra.mxu0 0
    %833 = vmatprep.subr.bf16.mxu0 0
    %834 = vmatpush2.bf16.xpose.msra.mxu0 0
    %835 = vmatprep.subr.bf16.mxu0 0
    %836 = vmatpush2.bf16.xpose.msra.mxu0 0
    %837 = vmatprep.mubr.bf16.mxu0 0
    %838 = vmatmul.mubr.bf16.gmra.mxu0 %v800
    %v839 = vpop.f32.mrf.mxu0
    %v840 = vadd.f32 %v205, %v839
    %v841 = vpop.f32.mrf.mxu0
    %v842 = vpop.f32.mrf.mxu0
    %v843 = vadd.f32 %v206, %v842
    %v844 = vpop.f32.mrf.mxu0
    %845 = vdwg.mxu0
    %v846 = vsel %vm264, %v840, -inf
    %847 = vmax.xlane.f32.xlu0 %v846
    %v848 = vpop.xlane.xlu0 %847
    %v849 = vsel %vm264, %v843, -inf
    %850 = vmax.xlane.f32.xlu0 %v849
    %v851 = vpop.xlane.xlu0 %850
    %v852 = vsub.f32 %v840, %v848
    %v853 = vsub.f32 %v843, %v851
    %v854 = vmul.f32 %v852, 1.442695
    %v855 = vpow.pop %v854
    %v856 = vmul.f32 %v853, 1.442695
    %v857 = vpow.pop %v856
    %v858 = vsel %vm264, %v855, 0.0
    %859 = vadd.xlane.f32.xlu0 %v858
    %v860 = vpop.xlane.xlu0 %859
    %v861 = vsel %vm264, %v857, 0.0
    %862 = vadd.xlane.f32.xlu0 %v861
    %v863 = vpop.xlane.xlu0 %862
    %v864 = vrcp.pop %v860
    %v865 = vrcp.pop %v863
    %v866 = vmul.f32 %v855, %v864
    %v867 = vmul.f32 %v857, %v865
    %v868 = vpack.c.bf16 %v867, %v866
    %869 = vrot.lane.b32.xlu0 %v795, 64
    %v870 = vpop.permute.xlu0 %869
    %v873 = vsel %vm264, %v868, 0
    %875 = vmatprep.subr.bf16.mxu0 0
    %876 = vmatpush1.bf16.msra.mxu0 0
    %877 = vmatprep.subr.bf16.mxu0 0
    %878 = vmatpush1.bf16.msra.mxu0 0
    %879 = vmatprep.subr.bf16.mxu0 0
    %880 = vmatpush1.bf16.msra.mxu0 0
    %881 = vmatprep.subr.bf16.mxu0 0
    %882 = vmatpush1.bf16.msra.mxu0 0
    %883 = vmatprep.subr.bf16.mxu0 0
    %884 = vmatpush1.bf16.msra.mxu0 0
    %885 = vmatprep.subr.bf16.mxu0 0
    %886 = vmatpush1.bf16.msra.mxu0 0
    %887 = vmatprep.subr.bf16.mxu0 0
    %888 = vmatpush1.bf16.msra.mxu0 0
    %889 = vmatprep.subr.bf16.mxu0 0
    %890 = vmatpush1.bf16.msra.mxu0 %v870
    %891 = vmatprep.subr.bf16.mxu0 0
    %892 = vmatpush2.bf16.msra.mxu0 0
    %893 = vmatprep.subr.bf16.mxu0 0
    %894 = vmatpush2.bf16.msra.mxu0 0
    %895 = vmatprep.subr.bf16.mxu0 0
    %896 = vmatpush2.bf16.msra.mxu0 0
    %897 = vmatprep.subr.bf16.mxu0 0
    %898 = vmatpush2.bf16.msra.mxu0 0
    %899 = vmatprep.subr.bf16.mxu0 0
    %900 = vmatpush2.bf16.msra.mxu0 0
    %901 = vmatprep.subr.bf16.mxu0 0
    %902 = vmatpush2.bf16.msra.mxu0 0
    %903 = vmatprep.subr.bf16.mxu0 0
    %904 = vmatpush2.bf16.msra.mxu0 0
    %905 = vmatprep.subr.bf16.mxu0 0
    %906 = vmatpush2.bf16.msra.mxu0 0
    %907 = vmatprep.mubr.bf16.mxu0 0
    %908 = vmatmul.mubr.bf16.gmra.mxu0 %v873
    %v909 = vpop.f32.mrf.mxu0
    %v910 = vadd.f32 0.0, %v909
    %v911 = vpop.f32.mrf.mxu0
    %v912 = vpop.f32.mrf.mxu0
    %v913 = vadd.f32 0.0, %v912
    %v914 = vpop.f32.mrf.mxu0
    %915 = vdwg.mxu0
    %916 = vrot.lane.b32.xlu0 %v795, 120
    %v917 = vpop.permute.xlu0 %916
    %918 = vrot.lane.b32.xlu0 %v795, 88
    %v919 = vpop.permute.xlu0 %918
    %v921 = vsel %vm216, %v917, 0
    %v924 = vsel %vm216, %v919, 0
    %926 = vmatprep.subr.bf16.mxu0 0
    %927 = vmatpush1.bf16.xpose.msra.mxu0 0
    %928 = vmatprep.subr.bf16.mxu0 0
    %929 = vmatpush1.bf16.xpose.msra.mxu0 0
    %930 = vmatprep.subr.bf16.mxu0 0
    %931 = vmatpush1.bf16.xpose.msra.mxu0 0
    %932 = vmatprep.subr.bf16.mxu0 0
    %933 = vmatpush1.bf16.xpose.msra.mxu0 0
    %934 = vmatprep.subr.bf16.mxu0 0
    %935 = vmatpush1.bf16.xpose.msra.mxu0 0
    %936 = vmatprep.subr.bf16.mxu0 0
    %937 = vmatpush1.bf16.xpose.msra.mxu0 0
    %938 = vmatprep.subr.bf16.mxu0 0
    %939 = vmatpush1.bf16.xpose.msra.mxu0 0
    %940 = vmatprep.subr.bf16.mxu0 0
    %941 = vmatpush1.bf16.xpose.msra.mxu0 %v924
    %942 = vmatprep.subr.bf16.mxu0 0
    %943 = vmatpush2.bf16.xpose.msra.mxu0 0
    %944 = vmatprep.subr.bf16.mxu0 0
    %945 = vmatpush2.bf16.xpose.msra.mxu0 0
    %946 = vmatprep.subr.bf16.mxu0 0
    %947 = vmatpush2.bf16.xpose.msra.mxu0 0
    %948 = vmatprep.subr.bf16.mxu0 0
    %949 = vmatpush2.bf16.xpose.msra.mxu0 0
    %950 = vmatprep.subr.bf16.mxu0 0
    %951 = vmatpush2.bf16.xpose.msra.mxu0 0
    %952 = vmatprep.subr.bf16.mxu0 0
    %953 = vmatpush2.bf16.xpose.msra.mxu0 0
    %954 = vmatprep.subr.bf16.mxu0 0
    %955 = vmatpush2.bf16.xpose.msra.mxu0 0
    %956 = vmatprep.subr.bf16.mxu0 0
    %957 = vmatpush2.bf16.xpose.msra.mxu0 0
    %958 = vmatprep.mubr.bf16.mxu0 0
    %959 = vmatmul.mubr.bf16.gmra.mxu0 %v921
    %v960 = vpop.f32.mrf.mxu0
    %v961 = vadd.f32 %v205, %v960
    %v962 = vpop.f32.mrf.mxu0
    %v963 = vpop.f32.mrf.mxu0
    %v964 = vadd.f32 %v206, %v963
    %v965 = vpop.f32.mrf.mxu0
    %966 = vdwg.mxu0
    %v967 = vsel %vm264, %v961, -inf
    %968 = vmax.xlane.f32.xlu0 %v967
    %v969 = vpop.xlane.xlu0 %968
    %v970 = vsel %vm264, %v964, -inf
    %971 = vmax.xlane.f32.xlu0 %v970
    %v972 = vpop.xlane.xlu0 %971
    %v973 = vsub.f32 %v961, %v969
    %v974 = vsub.f32 %v964, %v972
    %v975 = vmul.f32 %v973, 1.442695
    %v976 = vpow.pop %v975
    %v977 = vmul.f32 %v974, 1.442695
    %v978 = vpow.pop %v977
    %v979 = vsel %vm264, %v976, 0.0
    %980 = vadd.xlane.f32.xlu0 %v979
    %v981 = vpop.xlane.xlu0 %980
    %v982 = vsel %vm264, %v978, 0.0
    %983 = vadd.xlane.f32.xlu0 %v982
    %v984 = vpop.xlane.xlu0 %983
    %v985 = vrcp.pop %v981
    %v986 = vrcp.pop %v984
    %v987 = vmul.f32 %v976, %v985
    %v988 = vmul.f32 %v978, %v986
    %v989 = vpack.c.bf16 %v988, %v987
    %990 = vrot.lane.b32.xlu0 %v795, 56
    %v991 = vpop.permute.xlu0 %990
    %v994 = vsel %vm264, %v989, 0
    %996 = vmatprep.subr.bf16.mxu0 0
    %997 = vmatpush1.bf16.msra.mxu0 0
    %998 = vmatprep.subr.bf16.mxu0 0
    %999 = vmatpush1.bf16.msra.mxu0 0
    %1000 = vmatprep.subr.bf16.mxu0 0
    %1001 = vmatpush1.bf16.msra.mxu0 0
    %1002 = vmatprep.subr.bf16.mxu0 0
    %1003 = vmatpush1.bf16.msra.mxu0 0
    %1004 = vmatprep.subr.bf16.mxu0 0
    %1005 = vmatpush1.bf16.msra.mxu0 0
    %1006 = vmatprep.subr.bf16.mxu0 0
    %1007 = vmatpush1.bf16.msra.mxu0 0
    %1008 = vmatprep.subr.bf16.mxu0 0
    %1009 = vmatpush1.bf16.msra.mxu0 0
    %1010 = vmatprep.subr.bf16.mxu0 0
    %1011 = vmatpush1.bf16.msra.mxu0 %v991
    %1012 = vmatprep.subr.bf16.mxu0 0
    %1013 = vmatpush2.bf16.msra.mxu0 0
    %1014 = vmatprep.subr.bf16.mxu0 0
    %1015 = vmatpush2.bf16.msra.mxu0 0
    %1016 = vmatprep.subr.bf16.mxu0 0
    %1017 = vmatpush2.bf16.msra.mxu0 0
    %1018 = vmatprep.subr.bf16.mxu0 0
    %1019 = vmatpush2.bf16.msra.mxu0 0
    %1020 = vmatprep.subr.bf16.mxu0 0
    %1021 = vmatpush2.bf16.msra.mxu0 0
    %1022 = vmatprep.subr.bf16.mxu0 0
    %1023 = vmatpush2.bf16.msra.mxu0 0
    %1024 = vmatprep.subr.bf16.mxu0 0
    %1025 = vmatpush2.bf16.msra.mxu0 0
    %1026 = vmatprep.subr.bf16.mxu0 0
    %1027 = vmatpush2.bf16.msra.mxu0 0
    %1028 = vmatprep.mubr.bf16.mxu0 0
    %1029 = vmatmul.mubr.bf16.gmra.mxu0 %v994
    %v1030 = vpop.f32.mrf.mxu0
    %v1031 = vadd.f32 0.0, %v1030
    %v1032 = vpop.f32.mrf.mxu0
    %v1033 = vpop.f32.mrf.mxu0
    %v1034 = vadd.f32 0.0, %v1033
    %v1035 = vpop.f32.mrf.mxu0
    %1036 = vdwg.mxu0
    %1037 = vrot.lane.b32.xlu0 %v795, 112
    %v1038 = vpop.permute.xlu0 %1037
    %1039 = vrot.lane.b32.xlu0 %v795, 80
    %v1040 = vpop.permute.xlu0 %1039
    %v1042 = vsel %vm216, %v1038, 0
    %v1045 = vsel %vm216, %v1040, 0
    %1047 = vmatprep.subr.bf16.mxu0 0
    %1048 = vmatpush1.bf16.xpose.msra.mxu0 0
    %1049 = vmatprep.subr.bf16.mxu0 0
    %1050 = vmatpush1.bf16.xpose.msra.mxu0 0
    %1051 = vmatprep.subr.bf16.mxu0 0
    %1052 = vmatpush1.bf16.xpose.msra.mxu0 0
    %1053 = vmatprep.subr.bf16.mxu0 0
    %1054 = vmatpush1.bf16.xpose.msra.mxu0 0
    %1055 = vmatprep.subr.bf16.mxu0 0
    %1056 = vmatpush1.bf16.xpose.msra.mxu0 0
    %1057 = vmatprep.subr.bf16.mxu0 0
    %1058 = vmatpush1.bf16.xpose.msra.mxu0 0
    %1059 = vmatprep.subr.bf16.mxu0 0
    %1060 = vmatpush1.bf16.xpose.msra.mxu0 0
    %1061 = vmatprep.subr.bf16.mxu0 0
    %1062 = vmatpush1.bf16.xpose.msra.mxu0 %v1045
    %1063 = vmatprep.subr.bf16.mxu0 0
    %1064 = vmatpush2.bf16.xpose.msra.mxu0 0
    %1065 = vmatprep.subr.bf16.mxu0 0
    %1066 = vmatpush2.bf16.xpose.msra.mxu0 0
    %1067 = vmatprep.subr.bf16.mxu0 0
    %1068 = vmatpush2.bf16.xpose.msra.mxu0 0
    %1069 = vmatprep.subr.bf16.mxu0 0
    %1070 = vmatpush2.bf16.xpose.msra.mxu0 0
    %1071 = vmatprep.subr.bf16.mxu0 0
    %1072 = vmatpush2.bf16.xpose.msra.mxu0 0
    %1073 = vmatprep.subr.bf16.mxu0 0
    %1074 = vmatpush2.bf16.xpose.msra.mxu0 0
    %1075 = vmatprep.subr.bf16.mxu0 0
    %1076 = vmatpush2.bf16.xpose.msra.mxu0 0
    %1077 = vmatprep.subr.bf16.mxu0 0
    %1078 = vmatpush2.bf16.xpose.msra.mxu0 0
    %1079 = vmatprep.mubr.bf16.mxu0 0
    %1080 = vmatmul.mubr.bf16.gmra.mxu0 %v1042
    %v1081 = vpop.f32.mrf.mxu0
    %v1082 = vadd.f32 %v205, %v1081
    %v1083 = vpop.f32.mrf.mxu0
    %v1084 = vpop.f32.mrf.mxu0
    %v1085 = vadd.f32 %v206, %v1084
    %v1086 = vpop.f32.mrf.mxu0
    %1087 = vdwg.mxu0
    %v1088 = vsel %vm264, %v1082, -inf
    %1089 = vmax.xlane.f32.xlu0 %v1088
    %v1090 = vpop.xlane.xlu0 %1089
    %v1091 = vsel %vm264, %v1085, -inf
    %1092 = vmax.xlane.f32.xlu0 %v1091
    %v1093 = vpop.xlane.xlu0 %1092
    %v1094 = vsub.f32 %v1082, %v1090
    %v1095 = vsub.f32 %v1085, %v1093
    %v1096 = vmul.f32 %v1094, 1.442695
    %v1097 = vpow.pop %v1096
    %v1098 = vmul.f32 %v1095, 1.442695
    %v1099 = vpow.pop %v1098
    %v1100 = vsel %vm264, %v1097, 0.0
    %1101 = vadd.xlane.f32.xlu0 %v1100
    %v1102 = vpop.xlane.xlu0 %1101
    %v1103 = vsel %vm264, %v1099, 0.0
    %1104 = vadd.xlane.f32.xlu0 %v1103
    %v1105 = vpop.xlane.xlu0 %1104
    %v1106 = vrcp.pop %v1102
    %v1107 = vrcp.pop %v1105
    %v1108 = vmul.f32 %v1097, %v1106
    %v1109 = vmul.f32 %v1099, %v1107
    %v1110 = vpack.c.bf16 %v1109, %v1108
    %1111 = vrot.lane.b32.xlu0 %v795, 48
    %v1112 = vpop.permute.xlu0 %1111
    %v1115 = vsel %vm264, %v1110, 0
    %1117 = vmatprep.subr.bf16.mxu0 0
    %1118 = vmatpush1.bf16.msra.mxu0 0
    %1119 = vmatprep.subr.bf16.mxu0 0
    %1120 = vmatpush1.bf16.msra.mxu0 0
    %1121 = vmatprep.subr.bf16.mxu0 0
    %1122 = vmatpush1.bf16.msra.mxu0 0
    %1123 = vmatprep.subr.bf16.mxu0 0
    %1124 = vmatpush1.bf16.msra.mxu0 0
    %1125 = vmatprep.subr.bf16.mxu0 0
    %1126 = vmatpush1.bf16.msra.mxu0 0
    %1127 = vmatprep.subr.bf16.mxu0 0
    %1128 = vmatpush1.bf16.msra.mxu0 0
    %1129 = vmatprep.subr.bf16.mxu0 0
    %1130 = vmatpush1.bf16.msra.mxu0 0
    %1131 = vmatprep.subr.bf16.mxu0 0
    %1132 = vmatpush1.bf16.msra.mxu0 %v1112
    %1133 = vmatprep.subr.bf16.mxu0 0
    %1134 = vmatpush2.bf16.msra.mxu0 0
    %1135 = vmatprep.subr.bf16.mxu0 0
    %1136 = vmatpush2.bf16.msra.mxu0 0
    %1137 = vmatprep.subr.bf16.mxu0 0
    %1138 = vmatpush2.bf16.msra.mxu0 0
    %1139 = vmatprep.subr.bf16.mxu0 0
    %1140 = vmatpush2.bf16.msra.mxu0 0
    %1141 = vmatprep.subr.bf16.mxu0 0
    %1142 = vmatpush2.bf16.msra.mxu0 0
    %1143 = vmatprep.subr.bf16.mxu0 0
    %1144 = vmatpush2.bf16.msra.mxu0 0
    %1145 = vmatprep.subr.bf16.mxu0 0
    %1146 = vmatpush2.bf16.msra.mxu0 0
    %1147 = vmatprep.subr.bf16.mxu0 0
    %1148 = vmatpush2.bf16.msra.mxu0 0
    %1149 = vmatprep.mubr.bf16.mxu0 0
    %1150 = vmatmul.mubr.bf16.gmra.mxu0 %v1115
    %v1151 = vpop.f32.mrf.mxu0
    %v1152 = vadd.f32 0.0, %v1151
    %v1153 = vpop.f32.mrf.mxu0
    %v1154 = vpop.f32.mrf.mxu0
    %v1155 = vadd.f32 0.0, %v1154
    %v1156 = vpop.f32.mrf.mxu0
    %1157 = vdwg.mxu0
    %1158 = vrot.lane.b32.xlu0 %v795, 104
    %v1159 = vpop.permute.xlu0 %1158
    %1160 = vrot.lane.b32.xlu0 %v795, 72
    %v1161 = vpop.permute.xlu0 %1160
    %v1163 = vsel %vm216, %v1159, 0
    %v1166 = vsel %vm216, %v1161, 0
    %1168 = vmatprep.subr.bf16.mxu0 0
    %1169 = vmatpush1.bf16.xpose.msra.mxu0 0
    %1170 = vmatprep.subr.bf16.mxu0 0
    %1171 = vmatpush1.bf16.xpose.msra.mxu0 0
    %1172 = vmatprep.subr.bf16.mxu0 0
    %1173 = vmatpush1.bf16.xpose.msra.mxu0 0
    %1174 = vmatprep.subr.bf16.mxu0 0
    %1175 = vmatpush1.bf16.xpose.msra.mxu0 0
    %1176 = vmatprep.subr.bf16.mxu0 0
    %1177 = vmatpush1.bf16.xpose.msra.mxu0 0
    %1178 = vmatprep.subr.bf16.mxu0 0
    %1179 = vmatpush1.bf16.xpose.msra.mxu0 0
    %1180 = vmatprep.subr.bf16.mxu0 0
    %1181 = vmatpush1.bf16.xpose.msra.mxu0 0
    %1182 = vmatprep.subr.bf16.mxu0 0
    %1183 = vmatpush1.bf16.xpose.msra.mxu0 %v1166
    %1184 = vmatprep.subr.bf16.mxu0 0
    %1185 = vmatpush2.bf16.xpose.msra.mxu0 0
    %1186 = vmatprep.subr.bf16.mxu0 0
    %1187 = vmatpush2.bf16.xpose.msra.mxu0 0
    %1188 = vmatprep.subr.bf16.mxu0 0
    %1189 = vmatpush2.bf16.xpose.msra.mxu0 0
    %1190 = vmatprep.subr.bf16.mxu0 0
    %1191 = vmatpush2.bf16.xpose.msra.mxu0 0
    %1192 = vmatprep.subr.bf16.mxu0 0
    %1193 = vmatpush2.bf16.xpose.msra.mxu0 0
    %1194 = vmatprep.subr.bf16.mxu0 0
    %1195 = vmatpush2.bf16.xpose.msra.mxu0 0
    %1196 = vmatprep.subr.bf16.mxu0 0
    %1197 = vmatpush2.bf16.xpose.msra.mxu0 0
    %1198 = vmatprep.subr.bf16.mxu0 0
    %1199 = vmatpush2.bf16.xpose.msra.mxu0 0
    %1200 = vmatprep.mubr.bf16.mxu0 0
    %1201 = vmatmul.mubr.bf16.gmra.mxu0 %v1163
    %v1202 = vpop.f32.mrf.mxu0
    %v1203 = vadd.f32 %v205, %v1202
    %v1204 = vpop.f32.mrf.mxu0
    %v1205 = vpop.f32.mrf.mxu0
    %v1206 = vadd.f32 %v206, %v1205
    %v1207 = vpop.f32.mrf.mxu0
    %1208 = vdwg.mxu0
    %v1209 = vsel %vm264, %v1203, -inf
    %1210 = vmax.xlane.f32.xlu0 %v1209
    %v1211 = vpop.xlane.xlu0 %1210
    %v1212 = vsel %vm264, %v1206, -inf
    %1213 = vmax.xlane.f32.xlu0 %v1212
    %v1214 = vpop.xlane.xlu0 %1213
    %v1215 = vsub.f32 %v1203, %v1211
    %v1216 = vsub.f32 %v1206, %v1214
    %v1217 = vmul.f32 %v1215, 1.442695
    %v1218 = vpow.pop %v1217
    %v1219 = vmul.f32 %v1216, 1.442695
    %v1220 = vpow.pop %v1219
    %v1221 = vsel %vm264, %v1218, 0.0
    %1222 = vadd.xlane.f32.xlu0 %v1221
    %v1223 = vpop.xlane.xlu0 %1222
    %v1224 = vsel %vm264, %v1220, 0.0
    %1225 = vadd.xlane.f32.xlu0 %v1224
    %v1226 = vpop.xlane.xlu0 %1225
    %v1227 = vrcp.pop %v1223
    %v1228 = vrcp.pop %v1226
    %v1229 = vmul.f32 %v1218, %v1227
    %v1230 = vmul.f32 %v1220, %v1228
    %v1231 = vpack.c.bf16 %v1230, %v1229
    %1232 = vrot.lane.b32.xlu0 %v795, 40
    %v1233 = vpop.permute.xlu0 %1232
    %v1236 = vsel %vm264, %v1231, 0
    %1238 = vmatprep.subr.bf16.mxu0 0
    %1239 = vmatpush1.bf16.msra.mxu0 0
    %1240 = vmatprep.subr.bf16.mxu0 0
    %1241 = vmatpush1.bf16.msra.mxu0 0
    %1242 = vmatprep.subr.bf16.mxu0 0
    %1243 = vmatpush1.bf16.msra.mxu0 0
    %1244 = vmatprep.subr.bf16.mxu0 0
    %1245 = vmatpush1.bf16.msra.mxu0 0
    %1246 = vmatprep.subr.bf16.mxu0 0
    %1247 = vmatpush1.bf16.msra.mxu0 0
    %1248 = vmatprep.subr.bf16.mxu0 0
    %1249 = vmatpush1.bf16.msra.mxu0 0
    %1250 = vmatprep.subr.bf16.mxu0 0
    %1251 = vmatpush1.bf16.msra.mxu0 0
    %1252 = vmatprep.subr.bf16.mxu0 0
    %1253 = vmatpush1.bf16.msra.mxu0 %v1233
    %1254 = vmatprep.subr.bf16.mxu0 0
    %1255 = vmatpush2.bf16.msra.mxu0 0
    %1256 = vmatprep.subr.bf16.mxu0 0
    %1257 = vmatpush2.bf16.msra.mxu0 0
    %1258 = vmatprep.subr.bf16.mxu0 0
    %1259 = vmatpush2.bf16.msra.mxu0 0
    %1260 = vmatprep.subr.bf16.mxu0 0
    %1261 = vmatpush2.bf16.msra.mxu0 0
    %1262 = vmatprep.subr.bf16.mxu0 0
    %1263 = vmatpush2.bf16.msra.mxu0 0
    %1264 = vmatprep.subr.bf16.mxu0 0
    %1265 = vmatpush2.bf16.msra.mxu0 0
    %1266 = vmatprep.subr.bf16.mxu0 0
    %1267 = vmatpush2.bf16.msra.mxu0 0
    %1268 = vmatprep.subr.bf16.mxu0 0
    %1269 = vmatpush2.bf16.msra.mxu0 0
    %1270 = vmatprep.mubr.bf16.mxu0 0
    %1271 = vmatmul.mubr.bf16.gmra.mxu0 %v1236
    %v1272 = vpop.f32.mrf.mxu0
    %v1273 = vadd.f32 0.0, %v1272
    %v1274 = vpop.f32.mrf.mxu0
    %v1275 = vpop.f32.mrf.mxu0
    %v1276 = vadd.f32 0.0, %v1275
    %v1277 = vpop.f32.mrf.mxu0
    %1278 = vdwg.mxu0
    %1281 = vrot.lane.b32.xlu0 %v1031, 8
    %v1282 = vpop.permute.xlu0 %1281
    %1283 = vrot.lane.b32.xlu0 %v1034, 8
    %v1284 = vpop.permute.xlu0 %1283
    %1289 = vrot.lane.b32.xlu0 %v1152, 16
    %v1290 = vpop.permute.xlu0 %1289
    %1291 = vrot.lane.b32.xlu0 %v1155, 16
    %v1292 = vpop.permute.xlu0 %1291
    %1297 = vrot.lane.b32.xlu0 %v1273, 24
    %v1298 = vpop.permute.xlu0 %1297
    %1299 = vrot.lane.b32.xlu0 %v1276, 24
    %v1300 = vpop.permute.xlu0 %1299
    %v1303 = vsel %vm216, %v910, %v1282
    %v1304 = vsel %vm216, %v913, %v1284
    %v1305 = vsel %vm264, %v1303, %v1290
    %v1306 = vsel %vm264, %v1304, %v1292
    %v1307 = vsel %vm726, %v1305, %v1298
    %v1308 = vsel %vm726, %v1306, %v1300
    %v1309 = vpack.c.bf16 %v1308, %v1307
    %v1311 = vsel %vm748, %v1309, 0
    %1313 = vmatprep.subr.bf16.mxu0 0
    %1314 = vmatpush1.bf16.msra.mxu0 0
    %1315 = vmatprep.subr.bf16.mxu0 0
    %1316 = vmatpush1.bf16.msra.mxu0 0
    %1317 = vmatprep.subr.bf16.mxu0 0
    %1318 = vmatpush1.bf16.msra.mxu0 0
    %1319 = vmatprep.subr.bf16.mxu0 0
    %1320 = vmatpush1.bf16.msra.mxu0 0
    %1321 = vmatprep.subr.bf16.mxu0 0
    %1322 = vmatpush1.bf16.msra.mxu0 0
    %1323 = vmatprep.subr.bf16.mxu0 0
    %1324 = vmatpush1.bf16.msra.mxu0 0
    %1325 = vmatprep.subr.bf16.mxu0 0
    %1326 = vmatpush1.bf16.msra.mxu0 %v745
    %1327 = vmatprep.subr.bf16.mxu0 0
    %1328 = vmatpush1.bf16.msra.mxu0 %v744
    %1329 = vmatprep.subr.bf16.mxu0 0
    %1330 = vmatpush2.bf16.msra.mxu0 0
    %1331 = vmatprep.subr.bf16.mxu0 0
    %1332 = vmatpush2.bf16.msra.mxu0 0
    %1333 = vmatprep.subr.bf16.mxu0 0
    %1334 = vmatpush2.bf16.msra.mxu0 0
    %1335 = vmatprep.subr.bf16.mxu0 0
    %1336 = vmatpush2.bf16.msra.mxu0 0
    %1337 = vmatprep.subr.bf16.mxu0 0
    %1338 = vmatpush2.bf16.msra.mxu0 0
    %1339 = vmatprep.subr.bf16.mxu0 0
    %1340 = vmatpush2.bf16.msra.mxu0 0
    %1341 = vmatprep.subr.bf16.mxu0 0
    %1342 = vmatpush2.bf16.msra.mxu0 0
    %1343 = vmatprep.subr.bf16.mxu0 0
    %1344 = vmatpush2.bf16.msra.mxu0 0
    %1345 = vmatprep.mubr.bf16.mxu0 0
    %1346 = vmatmul.mubr.bf16.gmra.mxu0 %v1311
    %v1347 = vpop.f32.mrf.mxu0
    %v1348 = vadd.f32 %v734, %v1347
    %v1349 = vpop.f32.mrf.mxu0
    %v1350 = vpop.f32.mrf.mxu0
    %v1351 = vadd.f32 %v734, %v1350
    %v1352 = vpop.f32.mrf.mxu0
    %1353 = vdwg.mxu0
    %s1354 = scalar_lea.vmem [#allocation10], 16
    %1355 = vst [vmem:[%s1354] sm:$0xff] %v1348
    %1356 = vst [vmem:[%s1354 + $0x8] sm:$0xff] %v1351
    // Predicated region
    $region42: #{tpu_custom_call.1} parent=1 // pred_check
      _
    $region43: #{tpu_custom_call.1} parent=1 // pred_check_branch
      %1358 = sbr.rel (0) target = $region45
    $region44: #{tpu_custom_call.1} parent=1 // pred_region
      %s1360 = ssub.s32 512, 512
      %1361 = vsyncadd [#allocation4], %s1360
      %s1362 = sshll.u32 [#allocation10], 4
      %s1363 = int_to_ptr.vmem [resolvable:$true] %s1362
      %1368 = dma.vmem_to_hbm [thread:$0]  %s1363, 512, %s6, [#allocation4], 128, 128, 8
    $region45: #{tpu_custom_call.1} parent=1 // pred_fallthru
      _
    // Predicated region
    $region46: #{tpu_custom_call.1} parent=1 // pred_check
      _
    $region47: #{tpu_custom_call.1} parent=1 // pred_check_branch
      %1370 = sbr.rel (0) target = $region49
    $region48: #{tpu_custom_call.1} parent=1 // pred_region
      %1371 = dma.done [#allocation4], 512
    $region49: #{tpu_custom_call.1} parent=1 // pred_fallthru
      _
    %1372 = vsyncpa [#allocation3], 1
    %1373 = vsyncpa [#allocation6], 1
    %1374 = vsyncpa [#allocation9], 1
    %1375 = vsyncpa [#allocation4], 1

</llo_original>
